<compile_context>
chip_gen: v5e
topology: v5e:2x2
jax: 0.10.0
libtpu: 0.0.40
codegen_flags: <defaults>
</compile_context>

<pallas_src>
import functools

import jax
import jax.numpy as jnp
import numpy as np
from jax.experimental import pallas as pl
from jax.experimental.pallas import tpu as pltpu


def _mha_kernel(q_ref, mem_ref, bias_ref, wq_ref, wk_ref, wv_ref, wo_ref,
                o_ref, qh_scr, max_scr, sum_scr, acc_scr, *, num_heads):
    """One (batch, q-tile, kv-tile) step of fused multi-head attention.

    q_ref   : (1, tq, kd_q)      query antecedent tile
    mem_ref : (1, tk, kd_m)      memory antecedent tile
    bias_ref: (1, tq, tk)        additive bias tile (shared by all heads)
    wq_ref  : (kd_q, key_dim)    pre-transposed, scale-folded query weights
    wk_ref  : (kd_m, key_dim)    pre-transposed key weights
    wv_ref  : (kd_m, value_dim)  pre-transposed value weights
    wo_ref  : (value_dim, out_d) pre-transposed output weights
    o_ref   : (1, tq, out_d)
    qh_scr  : (H, tq, hd_k)      projected query tile (persists over kv tiles)
    max_scr : (H, tq, 1) f32     running row max
    sum_scr : (H, tq, 1) f32     running softmax denominator
    acc_scr : (H, tq, hd_v) f32  running (unnormalized) context accumulator
    """
    H = num_heads
    ki = pl.program_id(2)
    tq = q_ref.shape[1]
    tk = mem_ref.shape[1]
    key_dim = wq_ref.shape[1]
    value_dim = wv_ref.shape[1]
    hd_k = key_dim // H
    hd_v = value_dim // H
    dtype = q_ref.dtype

    @pl.when(ki == 0)
    def _():
        # All-heads query projection for this q tile (scale folded into Wq).
        x = q_ref[0]                                                  # (tq, kd_q)
        q_all = jnp.dot(x, wq_ref[...], preferred_element_type=jnp.float32)
        qh = jnp.swapaxes(q_all.reshape(tq, H, hd_k), 0, 1)           # (H, tq, hd_k)
        qh_scr[...] = qh.astype(qh_scr.dtype)
        max_scr[...] = jnp.full(max_scr.shape, -jnp.inf, max_scr.dtype)
        sum_scr[...] = jnp.zeros_like(sum_scr)
        acc_scr[...] = jnp.zeros_like(acc_scr)

    # All-heads key / value projections for this kv tile (full-width matmuls).
    m = mem_ref[0]                                                    # (tk, kd_m)
    k_all = jnp.dot(m, wk_ref[...], preferred_element_type=jnp.float32)
    v_all = jnp.dot(m, wv_ref[...], preferred_element_type=jnp.float32)
    kh = jnp.swapaxes(k_all.astype(dtype).reshape(tk, H, hd_k), 0, 1)  # (H, tk, hd_k)
    vh = jnp.swapaxes(v_all.astype(dtype).reshape(tk, H, hd_v), 0, 1)  # (H, tk, hd_v)

    # Scores for every head at once; bias broadcast over heads.
    s = jnp.einsum('hqd,hkd->hqk', qh_scr[...], kh,
                   preferred_element_type=jnp.float32)
    s = s + bias_ref[0][None, :, :]

    # Online (flash-style) softmax over the kv-tile axis.
    m_prev = max_scr[...]
    m_new = jnp.maximum(m_prev, jnp.max(s, axis=-1, keepdims=True))
    alpha = jnp.exp(m_prev - m_new)
    p = jnp.exp(s - m_new)
    sum_scr[...] = alpha * sum_scr[...] + jnp.sum(p, axis=-1, keepdims=True)
    acc_scr[...] = alpha * acc_scr[...] + jnp.einsum(
        'hqk,hkd->hqd', p.astype(dtype), vh, preferred_element_type=jnp.float32)
    max_scr[...] = m_new

    @pl.when(ki == pl.num_programs(2) - 1)
    def _():
        # Normalize once per head (small (H, tq, 1) reciprocal on the EUP),
        # combine heads and apply the output projection.
        ctx = acc_scr[...] * pl.reciprocal(sum_scr[...], approx=True)  # (H,tq,hd_v)
        ctx = jnp.swapaxes(ctx, 0, 1).reshape(tq, H * hd_v)            # (tq, value_dim)
        out = jnp.dot(ctx.astype(dtype), wo_ref[...],
                      preferred_element_type=jnp.float32)
        o_ref[0] = out.astype(o_ref.dtype)


def _pick_tile(total, target, multiple):
    """Largest tile <= target that divides `total` and is a multiple of
    `multiple`; falls back to the full extent (always legal for BlockSpecs)."""
    if total <= target:
        return total
    t = (target // multiple) * multiple
    while t >= multiple:
        if total % t == 0:
            return t
        t -= multiple
    return total


def multihead_attention_decoder(query_antecedent, memory_antecedent, bias,
                                wq, wk, wv, wo, num_heads):
    """Forward pass of MultiheadAttentionDecoder (incremental_state=None path).

    query_antecedent : [B, Tq, key_depth]
    memory_antecedent: [B, Tk, key_depth]  (or None -> self-attention)
    bias             : [1 or B, Tq, Tk] additive mask (added to every head), or None
    wq, wk           : [key_dim,   key_depth]   (nn.Linear weights, no bias)
    wv               : [value_dim, value_depth]
    wo               : [output_depth, value_dim]
    """
    if memory_antecedent is None:
        memory_antecedent = query_antecedent

    B, Tq, kd_q = query_antecedent.shape
    _, Tk, kd_m = memory_antecedent.shape
    key_dim = wq.shape[0]
    value_dim = wv.shape[0]
    output_depth = wo.shape[0]
    H = num_heads
    hd_k = key_dim // H
    hd_v = value_dim // H
    scale = float(hd_k) ** (-0.5)
    dtype = query_antecedent.dtype

    if bias is None:
        bias = jnp.zeros((1, Tq, Tk), dtype=jnp.float32)
    bias_B = bias.shape[0]

    # One-time weight layout transforms (plain JAX, outside the kernel):
    # transpose so the kernel computes x @ W directly, fold the query scale.
    wq_t = (jnp.transpose(wq) * scale).astype(dtype)   # (kd_q, key_dim)
    wk_t = jnp.transpose(wk).astype(dtype)             # (kd_m, key_dim)
    wv_t = jnp.transpose(wv).astype(dtype)             # (kd_m, value_dim)
    wo_t = jnp.transpose(wo).astype(dtype)             # (value_dim, output_depth)

    block_tq = _pick_tile(Tq, 256, 8)
    block_tk = _pick_tile(Tk, 512, 128)
    n_q = Tq // block_tq
    n_k = Tk // block_tk

    bias_idx = (lambda b, qi, ki: (0, qi, ki)) if bias_B == 1 else \
               (lambda b, qi, ki: (b, qi, ki))

    # Generation-aware VMEM budget (v7x has 64 MiB physical; v5e/v6e 128 MiB).
    try:
        vmem_cap = pltpu.get_tpu_info().vmem_capacity_bytes
        vmem_limit = min(int(vmem_cap * 3 // 4), 96 * 1024 * 1024)
    except Exception:
        vmem_limit = 48 * 1024 * 1024

    kernel = functools.partial(_mha_kernel, num_heads=H)

    out = pl.pallas_call(
        kernel,
        out_shape=jax.ShapeDtypeStruct((B, Tq, output_depth), dtype),
        grid_spec=pltpu.PrefetchScalarGridSpec(
            num_scalar_prefetch=0,
            grid=(B, n_q, n_k),
            in_specs=[
                pl.BlockSpec((1, block_tq, kd_q), lambda b, qi, ki: (b, qi, 0)),
                pl.BlockSpec((1, block_tk, kd_m), lambda b, qi, ki: (b, ki, 0)),
                pl.BlockSpec((1, block_tq, block_tk), bias_idx),
                # Weights stay VMEM-resident: full blocks, constant index maps.
                pl.BlockSpec((kd_q, key_dim), lambda b, qi, ki: (0, 0)),
                pl.BlockSpec((kd_m, key_dim), lambda b, qi, ki: (0, 0)),
                pl.BlockSpec((kd_m, value_dim), lambda b, qi, ki: (0, 0)),
                pl.BlockSpec((value_dim, output_depth), lambda b, qi, ki: (0, 0)),
            ],
            out_specs=pl.BlockSpec((1, block_tq, output_depth),
                                   lambda b, qi, ki: (b, qi, 0)),
            scratch_shapes=[
                pltpu.VMEM((H, block_tq, hd_k), dtype),        # projected q tile
                pltpu.VMEM((H, block_tq, 1), jnp.float32),     # running max
                pltpu.VMEM((H, block_tq, 1), jnp.float32),     # running sum
                pltpu.VMEM((H, block_tq, hd_v), jnp.float32),  # context accumulator
            ],
        ),
        compiler_params=pltpu.CompilerParams(
            dimension_semantics=("parallel", "parallel", "arbitrary"),
            vmem_limit_bytes=vmem_limit,
        ),
    )(query_antecedent, memory_antecedent, bias, wq_t, wk_t, wv_t, wo_t)
    return out


def _reference(query, memory, bias, wq, wk, wv, wo, num_heads):
    """Pure-JAX reference mirroring the PyTorch module exactly."""
    if memory is None:
        memory = query
    key_dim = wq.shape[0]
    hd_k = key_dim // num_heads
    q = (query @ wq.T) * (hd_k ** (-0.5))
    k = memory @ wk.T
    v = memory @ wv.T
    B, Tq, _ = q.shape
    Tk = k.shape[1]
    hd_v = v.shape[-1] // num_heads
    qh = q.reshape(B, Tq, num_heads, hd_k).transpose(0, 2, 1, 3)
    kh = k.reshape(B, Tk, num_heads, hd_k).transpose(0, 2, 1, 3)
    vh = v.reshape(B, Tk, num_heads, hd_v).transpose(0, 2, 1, 3)
    logits = jnp.einsum('bhqd,bhkd->bhqk', qh, kh) + bias[:, None, :, :]
    w = jax.nn.softmax(logits, axis=-1)
    ctx = jnp.einsum('bhqk,bhkd->bhqd', w, vh)
    ctx = ctx.transpose(0, 2, 1, 3).reshape(B, Tq, num_heads * hd_v)
    return ctx @ wo.T


if __name__ == "__main__":
    # Small shapes consistent with the module's N x T x C convention.
    B, Tq, Tk = 2, 8, 8
    key_depth = 32
    value_depth = 32
    output_depth = 32
    num_heads = 4

    key = jax.random.PRNGKey(0)
    k1, k2, k3, k4, k5, k6 = jax.random.split(key, 6)

    # Deterministic "uniform_(-0.1, 0.1)" style init for the Linear weights.
    wq = jax.random.uniform(k1, (key_depth, key_depth), jnp.float32, -0.1, 0.1)
    wk = jax.random.uniform(k2, (key_depth, key_depth), jnp.float32, -0.1, 0.1)
    wv = jax.random.uniform(k3, (value_depth, value_depth), jnp.float32, -0.1, 0.1)
    wo = jax.random.uniform(k4, (output_depth, value_depth), jnp.float32, -0.1, 0.1)

    query = jax.random.normal(k5, (B, Tq, key_depth), jnp.float32)
    memory = jax.random.normal(k6, (B, Tk, key_depth), jnp.float32)

    # Causal additive bias kept un-broadcast at [1, Tq, Tk] (shared over batch
    # and heads) to avoid redundant HBM traffic.
    causal = jnp.where(jnp.arange(Tk)[None, :] > jnp.arange(Tq)[:, None],
                       -1e9, 0.0).astype(jnp.float32)
    bias = causal[None]

    # TODO(synk): incremental_forward's stateful key/value buffer caching is
    # host-side bookkeeping (fairseq utils.get/set_incremental_state) and is
    # handled outside the kernel; the non-incremental forward path is what the
    # kernel implements.  (Attention dropout is received but never applied in
    # the reference dot_product_attention, so none is applied here either.)

    out = multihead_attention_decoder(query, memory, bias, wq, wk, wv, wo,
                                      num_heads)
    out = jax.block_until_ready(out)

    ref = _reference(query, memory, bias, wq, wk, wv, wo, num_heads)
    np.testing.assert_allclose(np.asarray(out), np.asarray(ref),
                               rtol=1e-2, atol=1e-3)
    print("KERNEL_OK")
</pallas_src>

<mosaic_0001>
module attributes {stable_mosaic.version = 11 : i64} {
  func.func @_mha_kernel(%arg0: i32, %arg1: i32, %arg2: i32, %arg3: memref<1x8x32xf32, #tpu.memory_space<vmem>>, %arg4: memref<1x8x32xf32, #tpu.memory_space<vmem>>, %arg5: memref<1x8x8xf32, #tpu.memory_space<vmem>>, %arg6: memref<32x32xf32, #tpu.memory_space<vmem>>, %arg7: memref<32x32xf32, #tpu.memory_space<vmem>>, %arg8: memref<32x32xf32, #tpu.memory_space<vmem>>, %arg9: memref<32x32xf32, #tpu.memory_space<vmem>>, %arg10: memref<1x8x32xf32, #tpu.memory_space<vmem>>, %arg11: memref<4x8x8xf32, #tpu.memory_space<vmem>>, %arg12: memref<4x8x1xf32, #tpu.memory_space<vmem>>, %arg13: memref<4x8x1xf32, #tpu.memory_space<vmem>>, %arg14: memref<4x8x8xf32, #tpu.memory_space<vmem>>) attributes {dimension_semantics = [#tpu.dimension_semantics<parallel>, #tpu.dimension_semantics<parallel>, #tpu.dimension_semantics<arbitrary>], iteration_bounds = array<i64: 2, 1, 1>, scalar_prefetch = 0 : i64, scratch_operands = 4 : i64, tpu.core_type = #tpu.core_type<tc>, window_params = [{transform_indices = @transform_0, window_bounds = array<i64: 1, 8, 32>}, {transform_indices = @transform_1, window_bounds = array<i64: 1, 8, 32>}, {transform_indices = @transform_2, window_bounds = array<i64: 1, 8, 8>}, {pipeline_mode = #tpu.pipeline_mode<synchronous>, transform_indices = @transform_3, window_bounds = array<i64: 32, 32>}, {pipeline_mode = #tpu.pipeline_mode<synchronous>, transform_indices = @transform_4, window_bounds = array<i64: 32, 32>}, {pipeline_mode = #tpu.pipeline_mode<synchronous>, transform_indices = @transform_5, window_bounds = array<i64: 32, 32>}, {pipeline_mode = #tpu.pipeline_mode<synchronous>, transform_indices = @transform_6, window_bounds = array<i64: 32, 32>}, {transform_indices = @transform_7, window_bounds = array<i64: 1, 8, 32>}]} {
    %c0_i32 = arith.constant 0 : i32
    %0 = arith.cmpi eq, %arg2, %c0_i32 : i32
    %1 = arith.extui %0 : i1 to i32
    %c0_i32_0 = arith.constant 0 : i32
    %2 = arith.cmpi ne, %1, %c0_i32_0 : i32
    scf.if %2 {
      %c0_38 = arith.constant 0 : index
      %c0_39 = arith.constant 0 : index
      %c0_40 = arith.constant 0 : index
      %45 = vector.load %arg3[%c0_38, %c0_39, %c0_40] : memref<1x8x32xf32, #tpu.memory_space<vmem>>, vector<1x8x32xf32>
      %46 = vector.shape_cast %45 : vector<1x8x32xf32> to vector<8x32xf32>
      %c0_41 = arith.constant 0 : index
      %c0_42 = arith.constant 0 : index
      %47 = vector.load %arg6[%c0_41, %c0_42] : memref<32x32xf32, #tpu.memory_space<vmem>>, vector<32x32xf32>
      %cst_43 = arith.constant dense<0.000000e+00> : vector<8x32xf32>
      %48 = tpu.matmul %46, %47, %cst_43 {dimension_numbers = #tpu.dot_dimension_numbers<[1], [0], [0], [1], [0, 0, 1, 1], [], []>} : vector<8x32xf32>, vector<32x32xf32>, vector<8x32xf32> -> vector<8x32xf32>
      %49 = vector.shape_cast %48 : vector<8x32xf32> to vector<8x4x8xf32>
      %50 = tpu.transpose %49, [1, 0, 2] : vector<8x4x8xf32> -> vector<4x8x8xf32>
      %c0_44 = arith.constant 0 : index
      %c0_45 = arith.constant 0 : index
      %c0_46 = arith.constant 0 : index
      %51 = vector.load %arg11[%c0_44, %c0_45, %c0_46] : memref<4x8x8xf32, #tpu.memory_space<vmem>>, vector<4x8x8xf32>
      tpu.vector_store %arg11[%c0_44, %c0_45, %c0_46], %50 {strides = array<i32>} : memref<4x8x8xf32, #tpu.memory_space<vmem>>, vector<4x8x8xf32>,
      %cst_47 = arith.constant 0xFF800000 : f32
      %52 = vector.broadcast %cst_47 : f32 to vector<4x8x1xf32>
      %c0_48 = arith.constant 0 : index
      %c0_49 = arith.constant 0 : index
      %c0_50 = arith.constant 0 : index
      %53 = vector.load %arg12[%c0_48, %c0_49, %c0_50] : memref<4x8x1xf32, #tpu.memory_space<vmem>>, vector<4x8x1xf32>
      tpu.vector_store %arg12[%c0_48, %c0_49, %c0_50], %52 {strides = array<i32>} : memref<4x8x1xf32, #tpu.memory_space<vmem>>, vector<4x8x1xf32>,
      %cst_51 = arith.constant 0.000000e+00 : f32
      %54 = vector.broadcast %cst_51 : f32 to vector<4x8x1xf32>
      %c0_52 = arith.constant 0 : index
      %c0_53 = arith.constant 0 : index
      %c0_54 = arith.constant 0 : index
      %55 = vector.load %arg13[%c0_52, %c0_53, %c0_54] : memref<4x8x1xf32, #tpu.memory_space<vmem>>, vector<4x8x1xf32>
      tpu.vector_store %arg13[%c0_52, %c0_53, %c0_54], %54 {strides = array<i32>} : memref<4x8x1xf32, #tpu.memory_space<vmem>>, vector<4x8x1xf32>,
      %cst_55 = arith.constant 0.000000e+00 : f32
      %56 = vector.broadcast %cst_55 : f32 to vector<4x8x8xf32>
      %c0_56 = arith.constant 0 : index
      %c0_57 = arith.constant 0 : index
      %c0_58 = arith.constant 0 : index
      %57 = vector.load %arg14[%c0_56, %c0_57, %c0_58] : memref<4x8x8xf32, #tpu.memory_space<vmem>>, vector<4x8x8xf32>
      tpu.vector_store %arg14[%c0_56, %c0_57, %c0_58], %56 {strides = array<i32>} : memref<4x8x8xf32, #tpu.memory_space<vmem>>, vector<4x8x8xf32>,
    } else {
    }
    %c0 = arith.constant 0 : index
    %c0_1 = arith.constant 0 : index
    %c0_2 = arith.constant 0 : index
    %3 = vector.load %arg4[%c0, %c0_1, %c0_2] : memref<1x8x32xf32, #tpu.memory_space<vmem>>, vector<1x8x32xf32>
    %4 = vector.shape_cast %3 : vector<1x8x32xf32> to vector<8x32xf32>
    %c0_3 = arith.constant 0 : index
    %c0_4 = arith.constant 0 : index
    %5 = vector.load %arg7[%c0_3, %c0_4] : memref<32x32xf32, #tpu.memory_space<vmem>>, vector<32x32xf32>
    %cst = arith.constant dense<0.000000e+00> : vector<8x32xf32>
    %6 = tpu.matmul %4, %5, %cst {dimension_numbers = #tpu.dot_dimension_numbers<[1], [0], [0], [1], [0, 0, 1, 1], [], []>} : vector<8x32xf32>, vector<32x32xf32>, vector<8x32xf32> -> vector<8x32xf32>
    %c0_5 = arith.constant 0 : index
    %c0_6 = arith.constant 0 : index
    %7 = vector.load %arg8[%c0_5, %c0_6] : memref<32x32xf32, #tpu.memory_space<vmem>>, vector<32x32xf32>
    %cst_7 = arith.constant dense<0.000000e+00> : vector<8x32xf32>
    %8 = tpu.matmul %4, %7, %cst_7 {dimension_numbers = #tpu.dot_dimension_numbers<[1], [0], [0], [1], [0, 0, 1, 1], [], []>} : vector<8x32xf32>, vector<32x32xf32>, vector<8x32xf32> -> vector<8x32xf32>
    %9 = vector.shape_cast %6 : vector<8x32xf32> to vector<8x4x8xf32>
    %10 = tpu.transpose %9, [1, 0, 2] : vector<8x4x8xf32> -> vector<4x8x8xf32>
    %11 = vector.shape_cast %8 : vector<8x32xf32> to vector<8x4x8xf32>
    %12 = tpu.transpose %11, [1, 0, 2] : vector<8x4x8xf32> -> vector<4x8x8xf32>
    %c0_8 = arith.constant 0 : index
    %c0_9 = arith.constant 0 : index
    %c0_10 = arith.constant 0 : index
    %13 = vector.load %arg11[%c0_8, %c0_9, %c0_10] : memref<4x8x8xf32, #tpu.memory_space<vmem>>, vector<4x8x8xf32>
    "tpu.trace_start"() <{level = 10 : i32, message = "hqd,hkd->hqk"}> : () -> ()
    %cst_11 = arith.constant dense<0.000000e+00> : vector<4x8x8xf32>
    %14 = tpu.matmul %13, %10, %cst_11 {dimension_numbers = #tpu.dot_dimension_numbers<[2], [2], [1], [1], [0, 0, 0, 1, 1, 1], [0], [0]>} : vector<4x8x8xf32>, vector<4x8x8xf32>, vector<4x8x8xf32> -> vector<4x8x8xf32>
    "tpu.trace_stop"() : () -> ()
    %c0_12 = arith.constant 0 : index
    %c0_13 = arith.constant 0 : index
    %c0_14 = arith.constant 0 : index
    %15 = vector.load %arg5[%c0_12, %c0_13, %c0_14] : memref<1x8x8xf32, #tpu.memory_space<vmem>>, vector<1x8x8xf32>
    %16 = vector.shape_cast %15 : vector<1x8x8xf32> to vector<8x8xf32>
    %17 = vector.shape_cast %16 : vector<8x8xf32> to vector<1x8x8xf32>
    %18 = vector.broadcast %17 : vector<1x8x8xf32> to vector<4x8x8xf32>
    %19 = arith.addf %14, %18 : vector<4x8x8xf32>
    %c0_15 = arith.constant 0 : index
    %c0_16 = arith.constant 0 : index
    %c0_17 = arith.constant 0 : index
    %20 = vector.load %arg12[%c0_15, %c0_16, %c0_17] : memref<4x8x1xf32, #tpu.memory_space<vmem>>, vector<4x8x1xf32>
    %cst_18 = arith.constant dense<0xFF800000> : vector<4x8xf32>
    %21 = vector.multi_reduction <maximumf>, %19, %cst_18 [2] : vector<4x8x8xf32> to vector<4x8xf32>
    %22 = vector.shape_cast %21 : vector<4x8xf32> to vector<4x8x1xf32>
    %23 = arith.maximumf %20, %22 : vector<4x8x1xf32>
    %24 = arith.subf %20, %23 : vector<4x8x1xf32>
    %25 = math.exp %24 : vector<4x8x1xf32>
    %26 = vector.broadcast %23 : vector<4x8x1xf32> to vector<4x8x8xf32>
    %27 = arith.subf %19, %26 : vector<4x8x8xf32>
    %28 = math.exp %27 : vector<4x8x8xf32>
    %c0_19 = arith.constant 0 : index
    %c0_20 = arith.constant 0 : index
    %c0_21 = arith.constant 0 : index
    %29 = vector.load %arg13[%c0_19, %c0_20, %c0_21] : memref<4x8x1xf32, #tpu.memory_space<vmem>>, vector<4x8x1xf32>
    %30 = arith.mulf %25, %29 : vector<4x8x1xf32>
    %cst_22 = arith.constant dense<0.000000e+00> : vector<4x8xf32>
    %31 = vector.multi_reduction <add>, %28, %cst_22 [2] : vector<4x8x8xf32> to vector<4x8xf32>
    %32 = vector.shape_cast %31 : vector<4x8xf32> to vector<4x8x1xf32>
    %33 = arith.addf %30, %32 : vector<4x8x1xf32>
    %c0_23 = arith.constant 0 : index
    %c0_24 = arith.constant 0 : index
    %c0_25 = arith.constant 0 : index
    %34 = vector.load %arg13[%c0_23, %c0_24, %c0_25] : memref<4x8x1xf32, #tpu.memory_space<vmem>>, vector<4x8x1xf32>
    tpu.vector_store %arg13[%c0_23, %c0_24, %c0_25], %33 {strides = array<i32>} : memref<4x8x1xf32, #tpu.memory_space<vmem>>, vector<4x8x1xf32>,
    %c0_26 = arith.constant 0 : index
    %c0_27 = arith.constant 0 : index
    %c0_28 = arith.constant 0 : index
    %35 = vector.load %arg14[%c0_26, %c0_27, %c0_28] : memref<4x8x8xf32, #tpu.memory_space<vmem>>, vector<4x8x8xf32>
    %36 = vector.broadcast %25 : vector<4x8x1xf32> to vector<4x8x8xf32>
    %37 = arith.mulf %36, %35 : vector<4x8x8xf32>
    "tpu.trace_start"() <{level = 10 : i32, message = "hqk,hkd->hqd"}> : () -> ()
    %cst_29 = arith.constant dense<0.000000e+00> : vector<4x8x8xf32>
    %38 = tpu.matmul %28, %12, %cst_29 {dimension_numbers = #tpu.dot_dimension_numbers<[2], [1], [1], [2], [0, 0, 0, 1, 1, 2], [0], [0]>} : vector<4x8x8xf32>, vector<4x8x8xf32>, vector<4x8x8xf32> -> vector<4x8x8xf32>
    "tpu.trace_stop"() : () -> ()
    %39 = arith.addf %37, %38 : vector<4x8x8xf32>
    %c0_30 = arith.constant 0 : index
    %c0_31 = arith.constant 0 : index
    %c0_32 = arith.constant 0 : index
    %40 = vector.load %arg14[%c0_30, %c0_31, %c0_32] : memref<4x8x8xf32, #tpu.memory_space<vmem>>, vector<4x8x8xf32>
    tpu.vector_store %arg14[%c0_30, %c0_31, %c0_32], %39 {strides = array<i32>} : memref<4x8x8xf32, #tpu.memory_space<vmem>>, vector<4x8x8xf32>,
    %c0_33 = arith.constant 0 : index
    %c0_34 = arith.constant 0 : index
    %c0_35 = arith.constant 0 : index
    %41 = vector.load %arg12[%c0_33, %c0_34, %c0_35] : memref<4x8x1xf32, #tpu.memory_space<vmem>>, vector<4x8x1xf32>
    tpu.vector_store %arg12[%c0_33, %c0_34, %c0_35], %23 {strides = array<i32>} : memref<4x8x1xf32, #tpu.memory_space<vmem>>, vector<4x8x1xf32>,
    %c0_i32_36 = arith.constant 0 : i32
    %42 = arith.cmpi eq, %arg2, %c0_i32_36 : i32
    %43 = arith.extui %42 : i1 to i32
    %c0_i32_37 = arith.constant 0 : i32
    %44 = arith.cmpi ne, %43, %c0_i32_37 : i32
    scf.if %44 {
      %c0_38 = arith.constant 0 : index
      %c0_39 = arith.constant 0 : index
      %c0_40 = arith.constant 0 : index
      %45 = vector.load %arg14[%c0_38, %c0_39, %c0_40] : memref<4x8x8xf32, #tpu.memory_space<vmem>>, vector<4x8x8xf32>
      %c0_41 = arith.constant 0 : index
      %c0_42 = arith.constant 0 : index
      %c0_43 = arith.constant 0 : index
      %46 = vector.load %arg13[%c0_41, %c0_42, %c0_43] : memref<4x8x1xf32, #tpu.memory_space<vmem>>, vector<4x8x1xf32>
      %47 = tpu.reciprocal %46 {approx = true} : vector<4x8x1xf32> -> vector<4x8x1xf32>
      %48 = vector.broadcast %47 : vector<4x8x1xf32> to vector<4x8x8xf32>
      %49 = arith.mulf %45, %48 : vector<4x8x8xf32>
      %50 = tpu.transpose %49, [1, 0, 2] : vector<4x8x8xf32> -> vector<8x4x8xf32>
      %51 = vector.shape_cast %50 : vector<8x4x8xf32> to vector<8x32xf32>
      %c0_44 = arith.constant 0 : index
      %c0_45 = arith.constant 0 : index
      %52 = vector.load %arg9[%c0_44, %c0_45] : memref<32x32xf32, #tpu.memory_space<vmem>>, vector<32x32xf32>
      %cst_46 = arith.constant dense<0.000000e+00> : vector<8x32xf32>
      %53 = tpu.matmul %51, %52, %cst_46 {dimension_numbers = #tpu.dot_dimension_numbers<[1], [0], [0], [1], [0, 0, 1, 1], [], []>} : vector<8x32xf32>, vector<32x32xf32>, vector<8x32xf32> -> vector<8x32xf32>
      %c0_47 = arith.constant 0 : index
      %c0_48 = arith.constant 0 : index
      %c0_49 = arith.constant 0 : index
      %54 = vector.load %arg10[%c0_47, %c0_48, %c0_49] : memref<1x8x32xf32, #tpu.memory_space<vmem>>, vector<1x8x32xf32>
      %55 = vector.shape_cast %54 : vector<1x8x32xf32> to vector<8x32xf32>
      %56 = vector.shape_cast %53 : vector<8x32xf32> to vector<1x8x32xf32>
      tpu.vector_store %arg10[%c0_47, %c0_48, %c0_49], %56 {strides = array<i32>} : memref<1x8x32xf32, #tpu.memory_space<vmem>>, vector<1x8x32xf32>,
    } else {
    }
    return
  }
  func.func @transform_0(%arg0: i32, %arg1: i32, %arg2: i32) -> (i32, i32, i32) {
    %c0_i32 = arith.constant 0 : i32
    %c0_i32_0 = arith.constant 0 : i32
    return %arg0, %arg1, %c0_i32 : i32, i32, i32
  }
  func.func @transform_1(%arg0: i32, %arg1: i32, %arg2: i32) -> (i32, i32, i32) {
    %c0_i32 = arith.constant 0 : i32
    %c0_i32_0 = arith.constant 0 : i32
    return %arg0, %arg2, %c0_i32 : i32, i32, i32
  }
  func.func @transform_2(%arg0: i32, %arg1: i32, %arg2: i32) -> (i32, i32, i32) {
    %c0_i32 = arith.constant 0 : i32
    %c0_i32_0 = arith.constant 0 : i32
    return %c0_i32, %arg1, %arg2 : i32, i32, i32
  }
  func.func @transform_3(%arg0: i32, %arg1: i32, %arg2: i32) -> (i32, i32) {
    %c0_i32 = arith.constant 0 : i32
    %c0_i32_0 = arith.constant 0 : i32
    %c0_i32_1 = arith.constant 0 : i32
    return %c0_i32, %c0_i32_0 : i32, i32
  }
  func.func @transform_4(%arg0: i32, %arg1: i32, %arg2: i32) -> (i32, i32) {
    %c0_i32 = arith.constant 0 : i32
    %c0_i32_0 = arith.constant 0 : i32
    %c0_i32_1 = arith.constant 0 : i32
    return %c0_i32, %c0_i32_0 : i32, i32
  }
  func.func @transform_5(%arg0: i32, %arg1: i32, %arg2: i32) -> (i32, i32) {
    %c0_i32 = arith.constant 0 : i32
    %c0_i32_0 = arith.constant 0 : i32
    %c0_i32_1 = arith.constant 0 : i32
    return %c0_i32, %c0_i32_0 : i32, i32
  }
  func.func @transform_6(%arg0: i32, %arg1: i32, %arg2: i32) -> (i32, i32) {
    %c0_i32 = arith.constant 0 : i32
    %c0_i32_0 = arith.constant 0 : i32
    %c0_i32_1 = arith.constant 0 : i32
    return %c0_i32, %c0_i32_0 : i32, i32
  }
  func.func @transform_7(%arg0: i32, %arg1: i32, %arg2: i32) -> (i32, i32, i32) {
    %c0_i32 = arith.constant 0 : i32
    %c0_i32_0 = arith.constant 0 : i32
    return %arg0, %arg1, %c0_i32 : i32, i32, i32
  }
}

</mosaic_0001>

<llo_original>
// kernel: tpu_custom_call.1
$region0: #{tpu_custom_call.1}
  #allocation0 [shape = 'u32[]', space=smem, size = 0x4, offset = 0x4, fixed_abs, tag = 'smem constant byte address 0x4 - core index']
  #allocation1 [shape = 'u32[72,128]{1,0:T(1,128)}', space=vmem, size = 0x9000, scoped, tag = 'internal scratch']
  #allocation2 [shape = 'f32[4,8,8]{2,1,0:T(8,128)}', space=vmem, size = 0x4000, scoped, tag = 'scratch operand']
  #allocation3 [shape = 'f32[4,8,1]{2,1,0:T(8,128)}', space=vmem, size = 0x4000, scoped, tag = 'scratch operand']
  #allocation4 [shape = 'f32[4,8,1]{2,1,0:T(8,128)}', space=vmem, size = 0x4000, scoped, tag = 'scratch operand']
  #allocation5 [shape = 'f32[4,8,8]{2,1,0:T(8,128)}', space=vmem, size = 0x4000, scoped, tag = 'scratch operand']
  %s0 = inlined_call_operand.hbm [shape: f32[2,8,32], index: 0, kind: input, shape index: {}]
  %s1 = inlined_call_operand.hbm [shape: f32[2,8,32], index: 1, kind: input, shape index: {}]
  %s2 = inlined_call_operand.hbm [shape: f32[1,8,8], index: 2, kind: input, shape index: {}]
  %s3 = inlined_call_operand.hbm [shape: f32[32,32], index: 3, kind: input, shape index: {}]
  %s4 = inlined_call_operand.hbm [shape: f32[32,32], index: 4, kind: input, shape index: {}]
  %s5 = inlined_call_operand.hbm [shape: f32[32,32], index: 5, kind: input, shape index: {}]
  %s6 = inlined_call_operand.hbm [shape: f32[32,32], index: 6, kind: input, shape index: {}]
  %s7 = inlined_call_operand.hbm [shape: f32[2,8,32], index: 7, kind: output, shape index: {}]
  %s8 = sld [smem:[#allocation0]]
  $region97: #{tpu_custom_call.1} parent=0
    _
  %s10 = ssub.s32 1, %s8
  %s11 = scalar_select 0, %s10, %s8
  $region1: #{tpu_custom_call.1} parent=0
    #allocation6 [shape = 'u8[8192]{0}', space=vmem, size = 0x2000, scoped, tag = 'input window, operand 0']
    #allocation7 [shape = 's32[2]{0}', space=sflag, size = 0x8, scoped, tag = 'scoped memory for tpu_custom_call.1']
    #allocation8 [shape = 's32[2]{0}', space=sflag, size = 0x8, scoped, tag = 'scoped memory for tpu_custom_call.1']
    #allocation9 [shape = 'u8[8192]{0}', space=vmem, size = 0x2000, scoped, tag = 'input window, operand 1']
    #allocation10 [shape = 's32[2]{0}', space=sflag, size = 0x8, scoped, tag = 'scoped memory for tpu_custom_call.1']
    #allocation11 [shape = 'u8[4096]{0}', space=vmem, size = 0x1000, scoped, tag = 'input window, operand 2, single buffered']
    #allocation12 [shape = 'u8[16384]{0}', space=vmem, size = 0x4000, scoped, tag = 'input window, operand 3, single buffered']
    #allocation13 [shape = 's32[1]{0}', space=sflag, size = 0x4, scoped, tag = 'scoped memory for tpu_custom_call.1']
    #allocation14 [shape = 'u8[16384]{0}', space=vmem, size = 0x4000, scoped, tag = 'input window, operand 4, single buffered']
    #allocation15 [shape = 'u8[16384]{0}', space=vmem, size = 0x4000, scoped, tag = 'input window, operand 5, single buffered']
    #allocation16 [shape = 's32[1]{0}', space=sflag, size = 0x4, scoped, tag = 'scoped memory for tpu_custom_call.1']
    #allocation17 [shape = 'u8[16384]{0}', space=vmem, size = 0x4000, scoped, tag = 'input window, operand 6, single buffered']
    #allocation18 [shape = 'u8[8192]{0}', space=vmem, size = 0x2000, scoped, tag = 'output window, operand 0']
    %12 = vsyncpa [#allocation7], 0
    %s13 = scalar_lea.sflag [#allocation7], 1
    %14 = vsyncpa %s13, 0
    %15 = vsyncpa [#allocation10], 0
    %s16 = scalar_lea.sflag [#allocation10], 1
    %17 = vsyncpa %s16, 0
    %18 = vsyncpa [#allocation13], 0
    %19 = vsyncpa [#allocation16], 0
    %20 = vsyncpa [#allocation8], 0
    %s21 = scalar_lea.sflag [#allocation8], 1
    %22 = vsyncpa %s21, 0
    loop: start=0, step=1, limit=4
    $region2: #{tpu_custom_call.1} parent=1 // loop_pre_header
      _
    $region3: #{tpu_custom_call.1} parent=1 // loop_header
      %s24 = sphi 0, %s28
      %p25 = scmp.ge.s32.totalorder %s24, 4
      %s31 = sphi 0, %s50
      %s32 = sphi 0, %s46
      %s33 = sphi 0, %s42
      %s34 = sphi 0, %s31
      %s35 = sphi 0, %s32
      %s36 = sphi 0, %s33
      %s37 = sphi 0, %s34
      %s38 = sphi 0, %s35
      %s39 = sphi 0, %s36
      %s55 = sphi 0, %s57
      %s58 = sphi 0, %s55
      %s59 = sphi 0, %s58
      %s75 = sphi 0, %s59
      %s83 = sphi 0, %s85
      %s86 = sphi 0, %s83
      %s87 = sphi 0, %s86
      %s103 = sphi 0, %s87
      %s111 = sphi 0, %s113
      %s114 = sphi 0, %s111
      %s115 = sphi 0, %s114
      %s131 = sphi 0, %s115
      %s135 = sphi 0, %s135
      %s137 = sphi 0, %s135
      %s138 = sphi 0, %s137
      %s152 = sphi 0, %s138
      %s156 = sphi 0, %s156
      %s158 = sphi 0, %s156
      %s159 = sphi 0, %s158
      %s173 = sphi 0, %s159
      %s177 = sphi 0, %s177
      %s179 = sphi 0, %s177
      %s180 = sphi 0, %s179
      %s194 = sphi 0, %s180
      %s198 = sphi 0, %s198
      %s200 = sphi 0, %s198
      %s201 = sphi 0, %s200
      %s215 = sphi 0, %s201
      %s223 = sphi 0, %s225
      %s226 = sphi 0, %s223
      %s227 = sphi 0, %s226
      %s243 = sphi 0, %s227
    $region4: #{tpu_custom_call.1} parent=1 // loop_header_branch
      %27 = sbr.rel (%p25) target = $region8
    $region5: #{tpu_custom_call.1} parent=1 // loop_body
      %s29 = ssub.s32 %s24, 1
      %s30 = ssub.s32 %s24, 2
      %s40 = sadd.s32 1, %s33
      %p41 = scmp.ge.s32.totalorder %s40, 1
      %s42 = scalar_select %p41, 0, %s40
      %s43 = sadd.s32 1, %s32
      %s44 = scalar_select %p41, %s43, %s32
      %p45 = scmp.ge.s32.totalorder %s44, 1
      %s46 = scalar_select %p45, 0, %s44
      %s47 = sadd.s32 1, %s31
      %s48 = scalar_select %p45, %s47, %s31
      %p49 = scmp.ge.s32.totalorder %s48, 2
      %s50 = scalar_select %p49, 0, %s48
      %s51 = ssub.s32 %s31, %s50
      %s52 = ssub.s32 %s32, %s46
      %s53 = sor.u32 %s51, %s52
      %p54 = scmp.eq.s32.totalorder %s53, 0
      %s56 = sadd.s32 %s55, 1
      %s57 = scalar_select %p54, %s55, %s56
      %p60 = pneg %p54
      %p61 = scmp.eq.s32.totalorder %s24, 1
      %p62 = por %p60, %p61
      %p63 = scmp.ne.s32.totalorder %s55, %s58
      %p64 = scmp.eq.s32.totalorder %s24, 0
      %p65 = por %p63, %p64
      %p66 = scmp.ne.s32.totalorder %s55, %s58
      %p67 = scmp.eq.s32.totalorder %s29, 1
      %p68 = por %p66, %p67
      %p69 = scmp.ne.s32.totalorder %s58, %s59
      %p70 = scmp.eq.s32.totalorder %s29, 0
      %p71 = por %p69, %p70
      %p72 = scmp.ne.s32.totalorder %s58, %s59
      %p73 = scmp.eq.s32.totalorder %s30, 1
      %p74 = por %p72, %p73
      %p76 = scmp.ne.s32.totalorder %s59, %s75
      %p77 = scmp.eq.s32.totalorder %s30, 0
      %p78 = por %p76, %p77
      %s79 = ssub.s32 %s31, %s50
      %s80 = ssub.s32 %s33, %s42
      %s81 = sor.u32 %s79, %s80
      %p82 = scmp.eq.s32.totalorder %s81, 0
      %s84 = sadd.s32 %s83, 1
      %s85 = scalar_select %p82, %s83, %s84
      %p88 = pneg %p82
      %p89 = scmp.eq.s32.totalorder %s24, 1
      %p90 = por %p88, %p89
      %p91 = scmp.ne.s32.totalorder %s83, %s86
      %p92 = scmp.eq.s32.totalorder %s24, 0
      %p93 = por %p91, %p92
      %p94 = scmp.ne.s32.totalorder %s83, %s86
      %p95 = scmp.eq.s32.totalorder %s29, 1
      %p96 = por %p94, %p95
      %p97 = scmp.ne.s32.totalorder %s86, %s87
      %p98 = scmp.eq.s32.totalorder %s29, 0
      %p99 = por %p97, %p98
      %p100 = scmp.ne.s32.totalorder %s86, %s87
      %p101 = scmp.eq.s32.totalorder %s30, 1
      %p102 = por %p100, %p101
      %p104 = scmp.ne.s32.totalorder %s87, %s103
      %p105 = scmp.eq.s32.totalorder %s30, 0
      %p106 = por %p104, %p105
      %s107 = ssub.s32 %s32, %s46
      %s108 = ssub.s32 %s33, %s42
      %s109 = sor.u32 %s107, %s108
      %p110 = scmp.eq.s32.totalorder %s109, 0
      %s112 = sadd.s32 %s111, 1
      %s113 = scalar_select %p110, %s111, %s112
      %p116 = pneg %p110
      %p117 = scmp.eq.s32.totalorder %s24, 1
      %p118 = por %p116, %p117
      %p119 = scmp.ne.s32.totalorder %s111, %s114
      %p120 = scmp.eq.s32.totalorder %s24, 0
      %p121 = por %p119, %p120
      %p122 = scmp.ne.s32.totalorder %s111, %s114
      %p123 = scmp.eq.s32.totalorder %s29, 1
      %p124 = por %p122, %p123
      %p125 = scmp.ne.s32.totalorder %s114, %s115
      %p126 = scmp.eq.s32.totalorder %s29, 0
      %p127 = por %p125, %p126
      %p128 = scmp.ne.s32.totalorder %s114, %s115
      %p129 = scmp.eq.s32.totalorder %s30, 1
      %p130 = por %p128, %p129
      %p132 = scmp.ne.s32.totalorder %s115, %s131
      %p133 = scmp.eq.s32.totalorder %s30, 0
      %p134 = por %p132, %p133
      %s136 = sadd.s32 %s135, 1
      %p139 = scmp.eq.s32.totalorder %s24, 1
      %p140 = scmp.ne.s32.totalorder %s135, %s137
      %p141 = scmp.eq.s32.totalorder %s24, 0
      %p142 = por %p140, %p141
      %p143 = scmp.ne.s32.totalorder %s135, %s137
      %p144 = scmp.eq.s32.totalorder %s29, 1
      %p145 = por %p143, %p144
      %p146 = scmp.ne.s32.totalorder %s137, %s138
      %p147 = scmp.eq.s32.totalorder %s29, 0
      %p148 = por %p146, %p147
      %p149 = scmp.ne.s32.totalorder %s137, %s138
      %p150 = scmp.eq.s32.totalorder %s30, 1
      %p151 = por %p149, %p150
      %p153 = scmp.ne.s32.totalorder %s138, %s152
      %p154 = scmp.eq.s32.totalorder %s30, 0
      %p155 = por %p153, %p154
      %s157 = sadd.s32 %s156, 1
      %p160 = scmp.eq.s32.totalorder %s24, 1
      %p161 = scmp.ne.s32.totalorder %s156, %s158
      %p162 = scmp.eq.s32.totalorder %s24, 0
      %p163 = por %p161, %p162
      %p164 = scmp.ne.s32.totalorder %s156, %s158
      %p165 = scmp.eq.s32.totalorder %s29, 1
      %p166 = por %p164, %p165
      %p167 = scmp.ne.s32.totalorder %s158, %s159
      %p168 = scmp.eq.s32.totalorder %s29, 0
      %p169 = por %p167, %p168
      %p170 = scmp.ne.s32.totalorder %s158, %s159
      %p171 = scmp.eq.s32.totalorder %s30, 1
      %p172 = por %p170, %p171
      %p174 = scmp.ne.s32.totalorder %s159, %s173
      %p175 = scmp.eq.s32.totalorder %s30, 0
      %p176 = por %p174, %p175
      %s178 = sadd.s32 %s177, 1
      %p181 = scmp.eq.s32.totalorder %s24, 1
      %p182 = scmp.ne.s32.totalorder %s177, %s179
      %p183 = scmp.eq.s32.totalorder %s24, 0
      %p184 = por %p182, %p183
      %p185 = scmp.ne.s32.totalorder %s177, %s179
      %p186 = scmp.eq.s32.totalorder %s29, 1
      %p187 = por %p185, %p186
      %p188 = scmp.ne.s32.totalorder %s179, %s180
      %p189 = scmp.eq.s32.totalorder %s29, 0
      %p190 = por %p188, %p189
      %p191 = scmp.ne.s32.totalorder %s179, %s180
      %p192 = scmp.eq.s32.totalorder %s30, 1
      %p193 = por %p191, %p192
      %p195 = scmp.ne.s32.totalorder %s180, %s194
      %p196 = scmp.eq.s32.totalorder %s30, 0
      %p197 = por %p195, %p196
      %s199 = sadd.s32 %s198, 1
      %p202 = scmp.eq.s32.totalorder %s24, 1
      %p203 = scmp.ne.s32.totalorder %s198, %s200
      %p204 = scmp.eq.s32.totalorder %s24, 0
      %p205 = por %p203, %p204
      %p206 = scmp.ne.s32.totalorder %s198, %s200
      %p207 = scmp.eq.s32.totalorder %s29, 1
      %p208 = por %p206, %p207
      %p209 = scmp.ne.s32.totalorder %s200, %s201
      %p210 = scmp.eq.s32.totalorder %s29, 0
      %p211 = por %p209, %p210
      %p212 = scmp.ne.s32.totalorder %s200, %s201
      %p213 = scmp.eq.s32.totalorder %s30, 1
      %p214 = por %p212, %p213
      %p216 = scmp.ne.s32.totalorder %s201, %s215
      %p217 = scmp.eq.s32.totalorder %s30, 0
      %p218 = por %p216, %p217
      %s219 = ssub.s32 %s31, %s50
      %s220 = ssub.s32 %s32, %s46
      %s221 = sor.u32 %s219, %s220
      %p222 = scmp.eq.s32.totalorder %s221, 0
      %s224 = sadd.s32 %s223, 1
      %s225 = scalar_select %p222, %s223, %s224
      %p228 = pneg %p222
      %p229 = scmp.eq.s32.totalorder %s24, 1
      %p230 = por %p228, %p229
      %p231 = scmp.ne.s32.totalorder %s223, %s226
      %p232 = scmp.eq.s32.totalorder %s24, 0
      %p233 = por %p231, %p232
      %p234 = scmp.ne.s32.totalorder %s223, %s226
      %p235 = scmp.eq.s32.totalorder %s29, 1
      %p236 = por %p234, %p235
      %p237 = scmp.ne.s32.totalorder %s226, %s227
      %p238 = scmp.eq.s32.totalorder %s29, 0
      %p239 = por %p237, %p238
      %p240 = scmp.ne.s32.totalorder %s226, %s227
      %p241 = scmp.eq.s32.totalorder %s30, 1
      %p242 = por %p240, %p241
      %p244 = scmp.ne.s32.totalorder %s227, %s243
      %p245 = scmp.eq.s32.totalorder %s30, 0
      %p246 = por %p244, %p245
      %p247 = scmp.le.s32.totalorder 1, %s24
      %p248 = scmp.lt.s32.totalorder %s24, 3
      %p249 = pnand %p247, %p248
      %p250 = pneg %p249
      // Predicated region
      $region9: #{tpu_custom_call.1} parent=5 // pred_check
        _
      $region10: #{tpu_custom_call.1} parent=5 // pred_check_branch
        %252 = sbr.rel (%p249) target = $region12
      $region11: #{tpu_custom_call.1} parent=5 // pred_region
        %s253 = ssub.s32 %s24, 1
        // Predicated region
        $region13: #{tpu_custom_call.1} parent=11 // pred_check
          %p254 = pneg %p127
        $region14: #{tpu_custom_call.1} parent=11 // pred_check_branch
          %256 = sbr.rel (%p254) target = $region16
        $region15: #{tpu_custom_call.1} parent=11 // pred_region
          %258 = vsyncadd [#allocation10], 0
          %s259 = sadd.s32 %s36, %s35
          %s260 = smul.addr %s259, 8
          %s261 = scalar_lea.hbm %s2, %s260
          %s263 = sshll.u32 %s261, 4
          %s264 = int_to_ptr.hbm [resolvable:$true] %s263
          %s265 = sshll.u32 [#allocation11], 4
          %s266 = int_to_ptr.vmem [resolvable:$true] %s265
          %268 = dma.hbm_to_vmem [thread:$0]  %s264, 128, %s266, [#allocation10]
        $region16: #{tpu_custom_call.1} parent=11 // pred_fallthru
          _
        // Predicated region
        $region17: #{tpu_custom_call.1} parent=11 // pred_check
          %p269 = pneg %p148
        $region18: #{tpu_custom_call.1} parent=11 // pred_check_branch
          %271 = sbr.rel (%p269) target = $region20
        $region19: #{tpu_custom_call.1} parent=11 // pred_region
          %273 = vsyncadd [#allocation13], 0
          %s274 = sshll.u32 %s3, 4
          %s275 = int_to_ptr.hbm [resolvable:$true] %s274
          %s276 = sshll.u32 [#allocation12], 4
          %s277 = int_to_ptr.vmem [resolvable:$true] %s276
          %282 = dma.hbm_to_vmem [thread:$0]  %s275, 512, %s277, [#allocation13], 128, 128, 8
        $region20: #{tpu_custom_call.1} parent=11 // pred_fallthru
          _
        // Predicated region
        $region21: #{tpu_custom_call.1} parent=11 // pred_check
          %p283 = pneg %p169
        $region22: #{tpu_custom_call.1} parent=11 // pred_check_branch
          %285 = sbr.rel (%p283) target = $region24
        $region23: #{tpu_custom_call.1} parent=11 // pred_region
          %287 = vsyncadd [#allocation13], 0
          %s288 = sshll.u32 %s4, 4
          %s289 = int_to_ptr.hbm [resolvable:$true] %s288
          %s290 = sshll.u32 [#allocation14], 4
          %s291 = int_to_ptr.vmem [resolvable:$true] %s290
          %296 = dma.hbm_to_vmem [thread:$0]  %s289, 512, %s291, [#allocation13], 128, 128, 8
        $region24: #{tpu_custom_call.1} parent=11 // pred_fallthru
          _
        // Predicated region
        $region25: #{tpu_custom_call.1} parent=11 // pred_check
          %p297 = pneg %p190
        $region26: #{tpu_custom_call.1} parent=11 // pred_check_branch
          %299 = sbr.rel (%p297) target = $region28
        $region27: #{tpu_custom_call.1} parent=11 // pred_region
          %301 = vsyncadd [#allocation16], 0
          %s302 = sshll.u32 %s5, 4
          %s303 = int_to_ptr.hbm [resolvable:$true] %s302
          %s304 = sshll.u32 [#allocation15], 4
          %s305 = int_to_ptr.vmem [resolvable:$true] %s304
          %310 = dma.hbm_to_vmem [thread:$0]  %s303, 512, %s305, [#allocation16], 128, 128, 8
        $region28: #{tpu_custom_call.1} parent=11 // pred_fallthru
          _
        // Predicated region
        $region29: #{tpu_custom_call.1} parent=11 // pred_check
          %p311 = pneg %p211
        $region30: #{tpu_custom_call.1} parent=11 // pred_check_branch
          %313 = sbr.rel (%p311) target = $region32
        $region31: #{tpu_custom_call.1} parent=11 // pred_region
          %315 = vsyncadd [#allocation16], 0
          %s316 = sshll.u32 %s6, 4
          %s317 = int_to_ptr.hbm [resolvable:$true] %s316
          %s318 = sshll.u32 [#allocation17], 4
          %s319 = int_to_ptr.vmem [resolvable:$true] %s318
          %324 = dma.hbm_to_vmem [thread:$0]  %s317, 512, %s319, [#allocation16], 128, 128, 8
        $region32: #{tpu_custom_call.1} parent=11 // pred_fallthru
          _
      $region12: #{tpu_custom_call.1} parent=5 // pred_fallthru
        _
      %p325 = scmp.lt.s32.totalorder %s24, 2
      // Predicated region
      $region33: #{tpu_custom_call.1} parent=5 // pred_check
        %p326 = pneg %p325
      $region34: #{tpu_custom_call.1} parent=5 // pred_check_branch
        %328 = sbr.rel (%p326) target = $region36
      $region35: #{tpu_custom_call.1} parent=5 // pred_region
        // Predicated region
        $region37: #{tpu_custom_call.1} parent=35 // pred_check
          %p329 = pneg %p65
        $region38: #{tpu_custom_call.1} parent=35 // pred_check_branch
          %331 = sbr.rel (%p329) target = $region40
        $region39: #{tpu_custom_call.1} parent=35 // pred_region
          %s332 = sand.u32 %s55, 1
          %s333 = scalar_lea.sflag [#allocation7], %s332
          %s334 = sand.u32 %s55, 1
          %s335 = smul.addr %s334, 8
          %s336 = scalar_lea.vmem [#allocation6], %s335
          %338 = vsyncadd %s333, 0
          %s339 = sadd.s32 %s32, %s31
          %s340 = smul.addr %s339, 8
          %s341 = scalar_lea.hbm %s0, %s340
          %s343 = sshll.u32 %s341, 4
          %s344 = int_to_ptr.hbm [resolvable:$true] %s343
          %s345 = sshll.u32 %s336, 4
          %s346 = int_to_ptr.vmem [resolvable:$true] %s345
          %348 = dma.hbm_to_vmem [thread:$0]  %s344, 128, %s346, %s333
        $region40: #{tpu_custom_call.1} parent=35 // pred_fallthru
          _
        // Predicated region
        $region41: #{tpu_custom_call.1} parent=35 // pred_check
          %p349 = pneg %p93
        $region42: #{tpu_custom_call.1} parent=35 // pred_check_branch
          %351 = sbr.rel (%p349) target = $region44
        $region43: #{tpu_custom_call.1} parent=35 // pred_region
          %s352 = sand.u32 %s24, 1
          %s353 = scalar_lea.sflag [#allocation10], %s352
          %s354 = sand.u32 %s83, 1
          %s355 = smul.addr %s354, 8
          %s356 = scalar_lea.vmem [#allocation9], %s355
          %358 = vsyncadd %s353, 0
          %s359 = sadd.s32 %s33, %s31
          %s360 = smul.addr %s359, 8
          %s361 = scalar_lea.hbm %s1, %s360
          %s363 = sshll.u32 %s361, 4
          %s364 = int_to_ptr.hbm [resolvable:$true] %s363
          %s365 = sshll.u32 %s356, 4
          %s366 = int_to_ptr.vmem [resolvable:$true] %s365
          %368 = dma.hbm_to_vmem [thread:$0]  %s364, 128, %s366, %s353
        $region44: #{tpu_custom_call.1} parent=35 // pred_fallthru
          _
      $region36: #{tpu_custom_call.1} parent=5 // pred_fallthru
        _
      %p369 = scmp.le.s32.totalorder 1, %s24
      %p370 = scmp.lt.s32.totalorder %s24, 3
      %p371 = pnand %p369, %p370
      %p372 = pneg %p371
      // Predicated region
      $region45: #{tpu_custom_call.1} parent=5 // pred_check
        _
      $region46: #{tpu_custom_call.1} parent=5 // pred_check_branch
        %374 = sbr.rel (%p371) target = $region48
      $region47: #{tpu_custom_call.1} parent=5 // pred_region
        %s375 = ssub.s32 %s24, 1
        %s376 = sand.u32 %s58, 1
        %s377 = scalar_lea.sflag [#allocation7], %s376
        %s378 = sand.u32 %s58, 1
        %s379 = smul.addr %s378, 8
        %s380 = scalar_lea.vmem [#allocation6], %s379
        // Predicated region
        $region49: #{tpu_custom_call.1} parent=47 // pred_check
          %p381 = pneg %p71
        $region50: #{tpu_custom_call.1} parent=47 // pred_check_branch
          %383 = sbr.rel (%p381) target = $region52
        $region51: #{tpu_custom_call.1} parent=47 // pred_region
          %385 = dma.done %s377, 128
        $region52: #{tpu_custom_call.1} parent=47 // pred_fallthru
          _
        %s386 = sand.u32 %s29, 1
        %s387 = scalar_lea.sflag [#allocation10], %s386
        %s388 = sand.u32 %s86, 1
        %s389 = smul.addr %s388, 8
        %s390 = scalar_lea.vmem [#allocation9], %s389
        // Predicated region
        $region53: #{tpu_custom_call.1} parent=47 // pred_check
          %p391 = pneg %p99
        $region54: #{tpu_custom_call.1} parent=47 // pred_check_branch
          %393 = sbr.rel (%p391) target = $region56
        $region55: #{tpu_custom_call.1} parent=47 // pred_region
          %395 = dma.done %s387, 128
        $region56: #{tpu_custom_call.1} parent=47 // pred_fallthru
          _
        // Predicated region
        $region57: #{tpu_custom_call.1} parent=47 // pred_check
          %p396 = pneg %p127
        $region58: #{tpu_custom_call.1} parent=47 // pred_check_branch
          %398 = sbr.rel (%p396) target = $region60
        $region59: #{tpu_custom_call.1} parent=47 // pred_region
          %400 = dma.done [#allocation10], 128
        $region60: #{tpu_custom_call.1} parent=47 // pred_fallthru
          _
        // Predicated region
        $region61: #{tpu_custom_call.1} parent=47 // pred_check
          %p401 = pneg %p148
        $region62: #{tpu_custom_call.1} parent=47 // pred_check_branch
          %403 = sbr.rel (%p401) target = $region64
        $region63: #{tpu_custom_call.1} parent=47 // pred_region
          %405 = dma.done [#allocation13], 512
        $region64: #{tpu_custom_call.1} parent=47 // pred_fallthru
          _
        // Predicated region
        $region65: #{tpu_custom_call.1} parent=47 // pred_check
          %p406 = pneg %p169
        $region66: #{tpu_custom_call.1} parent=47 // pred_check_branch
          %408 = sbr.rel (%p406) target = $region68
        $region67: #{tpu_custom_call.1} parent=47 // pred_region
          %410 = dma.done [#allocation13], 512
        $region68: #{tpu_custom_call.1} parent=47 // pred_fallthru
          _
        // Predicated region
        $region69: #{tpu_custom_call.1} parent=47 // pred_check
          %p411 = pneg %p190
        $region70: #{tpu_custom_call.1} parent=47 // pred_check_branch
          %413 = sbr.rel (%p411) target = $region72
        $region71: #{tpu_custom_call.1} parent=47 // pred_region
          %415 = dma.done [#allocation16], 512
        $region72: #{tpu_custom_call.1} parent=47 // pred_fallthru
          _
        // Predicated region
        $region73: #{tpu_custom_call.1} parent=47 // pred_check
          %p416 = pneg %p211
        $region74: #{tpu_custom_call.1} parent=47 // pred_check_branch
          %418 = sbr.rel (%p416) target = $region76
        $region75: #{tpu_custom_call.1} parent=47 // pred_region
          %420 = dma.done [#allocation16], 512
        $region76: #{tpu_custom_call.1} parent=47 // pred_fallthru
          _
        %s421 = sand.u32 %s58, 1
        %s422 = scalar_lea.sflag [#allocation7], %s421
        %s423 = sand.u32 %s58, 1
        %s424 = smul.addr %s423, 8
        %s425 = scalar_lea.vmem [#allocation6], %s424
        %p426 = pneg %p71
        %p427 = pneg %p68
        %s428 = sand.u32 %s29, 1
        %s429 = scalar_lea.sflag [#allocation10], %s428
        %s430 = sand.u32 %s86, 1
        %s431 = smul.addr %s430, 8
        %s432 = scalar_lea.vmem [#allocation9], %s431
        %p433 = pneg %p99
        %p434 = pneg %p96
        %p435 = pneg %p127
        %p436 = pneg %p124
        %p437 = pneg %p148
        %p438 = pneg %p145
        %p439 = pneg %p169
        %p440 = pneg %p166
        %p441 = pneg %p190
        %p442 = pneg %p187
        %p443 = pneg %p211
        %p444 = pneg %p208
        %p445 = pneg %p239
        %p446 = pneg %p236
        %s447 = sand.u32 %s226, 1
        %s448 = scalar_lea.sflag [#allocation8], %s447
        %s449 = sand.u32 %s226, 1
        %s450 = smul.addr %s449, 8
        %s451 = scalar_lea.vmem [#allocation18], %s450
        %p452 = scmp.eq.s32.totalorder %s36, 0
        // Predicated region
        $region77: #{tpu_custom_call.1} parent=47 // pred_check
          %p453 = pneg %p452
        $region78: #{tpu_custom_call.1} parent=47 // pred_check_branch
          %455 = sbr.rel (%p453) target = $region80
        $region79: #{tpu_custom_call.1} parent=47 // pred_region
          %v456 = vld [vmem:[%s380] sm:$0xff]
          %v457 = vld [vmem:[#allocation12] sm:$0xff]
          %v458 = vld [vmem:[#allocation12 + $0x8] sm:$0xff]
          %v459 = vld [vmem:[#allocation12 + $0x10] sm:$0xff]
          %v460 = vld [vmem:[#allocation12 + $0x18] sm:$0xff]
          %vm461 = vcmask 261120
          %v463 = vsel %vm461, %v456, 0
          %465 = vmatpush.msra.mxu0 0.0
          %466 = vmatpush.msra.mxu0 0.0
          %467 = vmatpush.msra.mxu0 0.0
          %468 = vmatpush.msra.mxu0 0.0
          %469 = vmatpush.msra.mxu0 0.0
          %470 = vmatpush.msra.mxu0 0.0
          %471 = vmatpush.msra.mxu0 0.0
          %472 = vmatpush.msra.mxu0 0.0
          %473 = vmatpush.msra.mxu0 0.0
          %474 = vmatpush.msra.mxu0 0.0
          %475 = vmatpush.msra.mxu0 0.0
          %476 = vmatpush.msra.mxu0 0.0
          %477 = vmatpush.msra.mxu0 %v460
          %478 = vmatpush.msra.mxu0 %v459
          %479 = vmatpush.msra.mxu0 %v458
          %480 = vmatpush.msra.mxu0 %v457
          %481 = vmatmul.f32.gmra.mxu0 %v463
          %v482 = vpop.f32.mrf.mxu0
          %v483 = vadd.f32 0.0, %v482
          %484 = vdwg.mxu0
          %486 = vrot.lane.b32.xlu0 %v483, 120
          %v487 = vpop.permute.xlu0 %486
          %489 = vrot.lane.b32.xlu0 %v483, 112
          %v490 = vpop.permute.xlu0 %489
          %492 = vrot.lane.b32.xlu0 %v483, 104
          %v493 = vpop.permute.xlu0 %492
          %v495 = vrot.slane %v490, 4
          %vm496 = vcmask 1047556
          %v497 = vsel %vm496, %v495, %v483
          %v498 = vrot.slane %v483, 4
          %v499 = vsel %vm496, %v490, %v498
          %v501 = vunpack.c.l.s4 1983009808
          %v502 = vunpack.c.0.s8 %v501
          %v503 = vperm.slane %v497, %v502
          %v505 = vunpack.c.l.s4 1983009808
          %v506 = vunpack.c.0.s8 %v505
          %v507 = vperm.slane %v499, %v506
          %v508 = vrot.slane %v493, 4
          %v509 = vsel %vm496, %v508, %v487
          %v510 = vrot.slane %v487, 4
          %v511 = vsel %vm496, %v493, %v510
          %v513 = vunpack.c.l.s4 1983009808
          %v514 = vunpack.c.0.s8 %v513
          %v515 = vperm.slane %v509, %v514
          %v517 = vunpack.c.l.s4 1983009808
          %v518 = vunpack.c.0.s8 %v517
          %v519 = vperm.slane %v511, %v518
          %v520 = vrot.slane %v515, 4
          %v521 = vsel %vm496, %v520, %v503
          %v522 = vrot.slane %v503, 4
          %v523 = vsel %vm496, %v515, %v522
          %v525 = vunpack.c.l.s4 1934713408
          %v526 = vunpack.c.0.s8 %v525
          %v527 = vperm.slane %v521, %v526
          %v529 = vunpack.c.l.s4 1934713408
          %v530 = vunpack.c.0.s8 %v529
          %v531 = vperm.slane %v523, %v530
          %v532 = vrot.slane %v519, 4
          %v533 = vsel %vm496, %v532, %v507
          %v534 = vrot.slane %v507, 4
          %v535 = vsel %vm496, %v519, %v534
          %v537 = vunpack.c.l.s4 1934713408
          %v538 = vunpack.c.0.s8 %v537
          %v539 = vperm.slane %v533, %v538
          %v541 = vunpack.c.l.s4 1934713408
          %v542 = vunpack.c.0.s8 %v541
          %v543 = vperm.slane %v535, %v542
          %v544 = vrot.slane %v527, 4
          %v545 = vsel %vm496, 0.0, %v544
          %v546 = vrot.slane %v531, 4
          %v547 = vsel %vm496, 0.0, %v546
          %v548 = vrot.slane %v539, 4
          %v549 = vsel %vm496, 0.0, %v548
          %v550 = vrot.slane %v543, 4
          %v551 = vsel %vm496, 0.0, %v550
          %v552 = vsel %vm496, %v546, %v527
          %v554 = vunpack.c.l.s4 1983009808
          %v555 = vunpack.c.0.s8 %v554
          %v556 = vperm.slane %v552, %v555
          %v557 = vrot.slane %v547, 4
          %v558 = vsel %vm496, %v557, %v545
          %v560 = vunpack.c.l.s4 1983009808
          %v561 = vunpack.c.0.s8 %v560
          %v562 = vperm.slane %v558, %v561
          %v563 = vsel %vm496, %v550, %v539
          %v565 = vunpack.c.l.s4 1983009808
          %v566 = vunpack.c.0.s8 %v565
          %v567 = vperm.slane %v563, %v566
          %v568 = vrot.slane %v551, 4
          %v569 = vsel %vm496, %v568, %v549
          %v571 = vunpack.c.l.s4 1983009808
          %v572 = vunpack.c.0.s8 %v571
          %v573 = vperm.slane %v569, %v572
          %v574 = vrot.slane %v562, 4
          %v575 = vsel %vm496, %v574, %v556
          %v576 = vrot.slane %v556, 4
          %v577 = vsel %vm496, %v562, %v576
          %v579 = vunpack.c.l.s4 1934713408
          %v580 = vunpack.c.0.s8 %v579
          %v581 = vperm.slane %v575, %v580
          %v583 = vunpack.c.l.s4 1934713408
          %v584 = vunpack.c.0.s8 %v583
          %v585 = vperm.slane %v577, %v584
          %v586 = vrot.slane %v573, 4
          %v587 = vsel %vm496, %v586, %v567
          %v588 = vrot.slane %v567, 4
          %v589 = vsel %vm496, %v573, %v588
          %v591 = vunpack.c.l.s4 1934713408
          %v592 = vunpack.c.0.s8 %v591
          %v593 = vperm.slane %v587, %v592
          %v595 = vunpack.c.l.s4 1934713408
          %v596 = vunpack.c.0.s8 %v595
          %v597 = vperm.slane %v589, %v596
          %v598 = vrot.slane %v593, 4
          %v599 = vsel %vm496, %v598, %v581
          %v600 = vrot.slane %v581, 4
          %v601 = vsel %vm496, %v593, %v600
          %v602 = vrot.slane %v597, 4
          %v603 = vsel %vm496, %v602, %v585
          %v604 = vrot.slane %v585, 4
          %v605 = vsel %vm496, %v597, %v604
          %vm606 = vcmask 64512
          %607 = vst.msk [vmem:[#allocation2] sm:$0xff] %vm606, %v599
          %608 = vst.msk [vmem:[#allocation2 + $0x8] sm:$0xff] %vm606, %v601
          %609 = vst.msk [vmem:[#allocation2 + $0x10] sm:$0xff] %vm606, %v603
          %610 = vst.msk [vmem:[#allocation2 + $0x18] sm:$0xff] %vm606, %v605
          %vm611 = vcmask 7168
          %612 = vst.msk [vmem:[#allocation3] sm:$0xff] %vm611, -inf
          %613 = vst.msk [vmem:[#allocation3 + $0x8] sm:$0xff] %vm611, -inf
          %614 = vst.msk [vmem:[#allocation3 + $0x10] sm:$0xff] %vm611, -inf
          %615 = vst.msk [vmem:[#allocation3 + $0x18] sm:$0xff] %vm611, -inf
          %616 = vst.msk [vmem:[#allocation4] sm:$0xff] %vm611, 0.0
          %617 = vst.msk [vmem:[#allocation4 + $0x8] sm:$0xff] %vm611, 0.0
          %618 = vst.msk [vmem:[#allocation4 + $0x10] sm:$0xff] %vm611, 0.0
          %619 = vst.msk [vmem:[#allocation4 + $0x18] sm:$0xff] %vm611, 0.0
          %620 = vst.msk [vmem:[#allocation5] sm:$0xff] %vm606, 0.0
          %621 = vst.msk [vmem:[#allocation5 + $0x8] sm:$0xff] %vm606, 0.0
          %622 = vst.msk [vmem:[#allocation5 + $0x10] sm:$0xff] %vm606, 0.0
          %623 = vst.msk [vmem:[#allocation5 + $0x18] sm:$0xff] %vm606, 0.0
        $region80: #{tpu_custom_call.1} parent=47 // pred_fallthru
          _
        %v624 = vld [vmem:[%s390] sm:$0xff]
        %v625 = vld [vmem:[#allocation14] sm:$0xff]
        %v626 = vld [vmem:[#allocation14 + $0x8] sm:$0xff]
        %v627 = vld [vmem:[#allocation14 + $0x10] sm:$0xff]
        %v628 = vld [vmem:[#allocation14 + $0x18] sm:$0xff]
        %vm629 = vcmask 261120
        %v631 = vsel %vm629, %v624, 0
        %633 = vmatpush.msra.mxu0 0.0
        %634 = vmatpush.msra.mxu0 0.0
        %635 = vmatpush.msra.mxu0 0.0
        %636 = vmatpush.msra.mxu0 0.0
        %637 = vmatpush.msra.mxu0 0.0
        %638 = vmatpush.msra.mxu0 0.0
        %639 = vmatpush.msra.mxu0 0.0
        %640 = vmatpush.msra.mxu0 0.0
        %641 = vmatpush.msra.mxu0 0.0
        %642 = vmatpush.msra.mxu0 0.0
        %643 = vmatpush.msra.mxu0 0.0
        %644 = vmatpush.msra.mxu0 0.0
        %645 = vmatpush.msra.mxu0 %v628
        %646 = vmatpush.msra.mxu0 %v627
        %647 = vmatpush.msra.mxu0 %v626
        %648 = vmatpush.msra.mxu0 %v625
        %649 = vmatmul.f32.gmra.mxu0 %v631
        %v650 = vpop.f32.mrf.mxu0
        %v651 = vadd.f32 0.0, %v650
        %652 = vdwg.mxu0
        %v653 = vld [vmem:[#allocation15] sm:$0xff]
        %v654 = vld [vmem:[#allocation15 + $0x8] sm:$0xff]
        %v655 = vld [vmem:[#allocation15 + $0x10] sm:$0xff]
        %v656 = vld [vmem:[#allocation15 + $0x18] sm:$0xff]
        %657 = vmatpush.msra.mxu0 0.0
        %658 = vmatpush.msra.mxu0 0.0
        %659 = vmatpush.msra.mxu0 0.0
        %660 = vmatpush.msra.mxu0 0.0
        %661 = vmatpush.msra.mxu0 0.0
        %662 = vmatpush.msra.mxu0 0.0
        %663 = vmatpush.msra.mxu0 0.0
        %664 = vmatpush.msra.mxu0 0.0
        %665 = vmatpush.msra.mxu0 0.0
        %666 = vmatpush.msra.mxu0 0.0
        %667 = vmatpush.msra.mxu0 0.0
        %668 = vmatpush.msra.mxu0 0.0
        %669 = vmatpush.msra.mxu0 %v656
        %670 = vmatpush.msra.mxu0 %v655
        %671 = vmatpush.msra.mxu0 %v654
        %672 = vmatpush.msra.mxu0 %v653
        %673 = vmatmul.f32.gmra.mxu0 %v631
        %v674 = vpop.f32.mrf.mxu0
        %v675 = vadd.f32 0.0, %v674
        %676 = vdwg.mxu0
        %678 = vrot.lane.b32.xlu0 %v651, 120
        %v679 = vpop.permute.xlu0 %678
        %681 = vrot.lane.b32.xlu0 %v651, 112
        %v682 = vpop.permute.xlu0 %681
        %684 = vrot.lane.b32.xlu0 %v651, 104
        %v685 = vpop.permute.xlu0 %684
        %v687 = vrot.slane %v682, 4
        %vm688 = vcmask 1047556
        %v689 = vsel %vm688, %v687, %v651
        %v690 = vrot.slane %v651, 4
        %v691 = vsel %vm688, %v682, %v690
        %v693 = vunpack.c.l.s4 1983009808
        %v694 = vunpack.c.0.s8 %v693
        %v695 = vperm.slane %v689, %v694
        %v697 = vunpack.c.l.s4 1983009808
        %v698 = vunpack.c.0.s8 %v697
        %v699 = vperm.slane %v691, %v698
        %v700 = vrot.slane %v685, 4
        %v701 = vsel %vm688, %v700, %v679
        %v702 = vrot.slane %v679, 4
        %v703 = vsel %vm688, %v685, %v702
        %v705 = vunpack.c.l.s4 1983009808
        %v706 = vunpack.c.0.s8 %v705
        %v707 = vperm.slane %v701, %v706
        %v709 = vunpack.c.l.s4 1983009808
        %v710 = vunpack.c.0.s8 %v709
        %v711 = vperm.slane %v703, %v710
        %v712 = vrot.slane %v707, 4
        %v713 = vsel %vm688, %v712, %v695
        %v714 = vrot.slane %v695, 4
        %v715 = vsel %vm688, %v707, %v714
        %v717 = vunpack.c.l.s4 1934713408
        %v718 = vunpack.c.0.s8 %v717
        %v719 = vperm.slane %v713, %v718
        %v721 = vunpack.c.l.s4 1934713408
        %v722 = vunpack.c.0.s8 %v721
        %v723 = vperm.slane %v715, %v722
        %v724 = vrot.slane %v711, 4
        %v725 = vsel %vm688, %v724, %v699
        %v726 = vrot.slane %v699, 4
        %v727 = vsel %vm688, %v711, %v726
        %v729 = vunpack.c.l.s4 1934713408
        %v730 = vunpack.c.0.s8 %v729
        %v731 = vperm.slane %v725, %v730
        %v733 = vunpack.c.l.s4 1934713408
        %v734 = vunpack.c.0.s8 %v733
        %v735 = vperm.slane %v727, %v734
        %v736 = vrot.slane %v719, 4
        %v737 = vsel %vm688, 0.0, %v736
        %v738 = vrot.slane %v723, 4
        %v739 = vsel %vm688, 0.0, %v738
        %v740 = vrot.slane %v731, 4
        %v741 = vsel %vm688, 0.0, %v740
        %v742 = vrot.slane %v735, 4
        %v743 = vsel %vm688, 0.0, %v742
        %v744 = vsel %vm688, %v738, %v719
        %v746 = vunpack.c.l.s4 1983009808
        %v747 = vunpack.c.0.s8 %v746
        %v748 = vperm.slane %v744, %v747
        %v749 = vrot.slane %v739, 4
        %v750 = vsel %vm688, %v749, %v737
        %v752 = vunpack.c.l.s4 1983009808
        %v753 = vunpack.c.0.s8 %v752
        %v754 = vperm.slane %v750, %v753
        %v755 = vsel %vm688, %v742, %v731
        %v757 = vunpack.c.l.s4 1983009808
        %v758 = vunpack.c.0.s8 %v757
        %v759 = vperm.slane %v755, %v758
        %v760 = vrot.slane %v743, 4
        %v761 = vsel %vm688, %v760, %v741
        %v763 = vunpack.c.l.s4 1983009808
        %v764 = vunpack.c.0.s8 %v763
        %v765 = vperm.slane %v761, %v764
        %v766 = vrot.slane %v754, 4
        %v767 = vsel %vm688, %v766, %v748
        %v768 = vrot.slane %v748, 4
        %v769 = vsel %vm688, %v754, %v768
        %v771 = vunpack.c.l.s4 1934713408
        %v772 = vunpack.c.0.s8 %v771
        %v773 = vperm.slane %v767, %v772
        %v775 = vunpack.c.l.s4 1934713408
        %v776 = vunpack.c.0.s8 %v775
        %v777 = vperm.slane %v769, %v776
        %v778 = vrot.slane %v765, 4
        %v779 = vsel %vm688, %v778, %v759
        %v780 = vrot.slane %v759, 4
        %v781 = vsel %vm688, %v765, %v780
        %v783 = vunpack.c.l.s4 1934713408
        %v784 = vunpack.c.0.s8 %v783
        %v785 = vperm.slane %v779, %v784
        %v787 = vunpack.c.l.s4 1934713408
        %v788 = vunpack.c.0.s8 %v787
        %v789 = vperm.slane %v781, %v788
        %v790 = vrot.slane %v785, 4
        %v791 = vsel %vm688, %v790, %v773
        %v792 = vrot.slane %v773, 4
        %v793 = vsel %vm688, %v785, %v792
        %v794 = vrot.slane %v789, 4
        %v795 = vsel %vm688, %v794, %v777
        %v796 = vrot.slane %v777, 4
        %v797 = vsel %vm688, %v789, %v796
        %799 = vrot.lane.b32.xlu0 %v675, 120
        %v800 = vpop.permute.xlu0 %799
        %802 = vrot.lane.b32.xlu0 %v675, 112
        %v803 = vpop.permute.xlu0 %802
        %805 = vrot.lane.b32.xlu0 %v675, 104
        %v806 = vpop.permute.xlu0 %805
        %v808 = vrot.slane %v803, 4
        %v809 = vsel %vm688, %v808, %v675
        %v810 = vrot.slane %v675, 4
        %v811 = vsel %vm688, %v803, %v810
        %v813 = vunpack.c.l.s4 1983009808
        %v814 = vunpack.c.0.s8 %v813
        %v815 = vperm.slane %v809, %v814
        %v817 = vunpack.c.l.s4 1983009808
        %v818 = vunpack.c.0.s8 %v817
        %v819 = vperm.slane %v811, %v818
        %v820 = vrot.slane %v806, 4
        %v821 = vsel %vm688, %v820, %v800
        %v822 = vrot.slane %v800, 4
        %v823 = vsel %vm688, %v806, %v822
        %v825 = vunpack.c.l.s4 1983009808
        %v826 = vunpack.c.0.s8 %v825
        %v827 = vperm.slane %v821, %v826
        %v829 = vunpack.c.l.s4 1983009808
        %v830 = vunpack.c.0.s8 %v829
        %v831 = vperm.slane %v823, %v830
        %v832 = vrot.slane %v827, 4
        %v833 = vsel %vm688, %v832, %v815
        %v834 = vrot.slane %v815, 4
        %v835 = vsel %vm688, %v827, %v834
        %v837 = vunpack.c.l.s4 1934713408
        %v838 = vunpack.c.0.s8 %v837
        %v839 = vperm.slane %v833, %v838
        %v841 = vunpack.c.l.s4 1934713408
        %v842 = vunpack.c.0.s8 %v841
        %v843 = vperm.slane %v835, %v842
        %v844 = vrot.slane %v831, 4
        %v845 = vsel %vm688, %v844, %v819
        %v846 = vrot.slane %v819, 4
        %v847 = vsel %vm688, %v831, %v846
        %v849 = vunpack.c.l.s4 1934713408
        %v850 = vunpack.c.0.s8 %v849
        %v851 = vperm.slane %v845, %v850
        %v853 = vunpack.c.l.s4 1934713408
        %v854 = vunpack.c.0.s8 %v853
        %v855 = vperm.slane %v847, %v854
        %v856 = vrot.slane %v839, 4
        %v857 = vsel %vm688, 0.0, %v856
        %v858 = vrot.slane %v843, 4
        %v859 = vsel %vm688, 0.0, %v858
        %v860 = vrot.slane %v851, 4
        %v861 = vsel %vm688, 0.0, %v860
        %v862 = vrot.slane %v855, 4
        %v863 = vsel %vm688, 0.0, %v862
        %v864 = vsel %vm688, %v858, %v839
        %v866 = vunpack.c.l.s4 1983009808
        %v867 = vunpack.c.0.s8 %v866
        %v868 = vperm.slane %v864, %v867
        %v869 = vrot.slane %v859, 4
        %v870 = vsel %vm688, %v869, %v857
        %v872 = vunpack.c.l.s4 1983009808
        %v873 = vunpack.c.0.s8 %v872
        %v874 = vperm.slane %v870, %v873
        %v875 = vsel %vm688, %v862, %v851
        %v877 = vunpack.c.l.s4 1983009808
        %v878 = vunpack.c.0.s8 %v877
        %v879 = vperm.slane %v875, %v878
        %v880 = vrot.slane %v863, 4
        %v881 = vsel %vm688, %v880, %v861
        %v883 = vunpack.c.l.s4 1983009808
        %v884 = vunpack.c.0.s8 %v883
        %v885 = vperm.slane %v881, %v884
        %v886 = vrot.slane %v874, 4
        %v887 = vsel %vm688, %v886, %v868
        %v888 = vrot.slane %v868, 4
        %v889 = vsel %vm688, %v874, %v888
        %v891 = vunpack.c.l.s4 1934713408
        %v892 = vunpack.c.0.s8 %v891
        %v893 = vperm.slane %v887, %v892
        %v895 = vunpack.c.l.s4 1934713408
        %v896 = vunpack.c.0.s8 %v895
        %v897 = vperm.slane %v889, %v896
        %v898 = vrot.slane %v885, 4
        %v899 = vsel %vm688, %v898, %v879
        %v900 = vrot.slane %v879, 4
        %v901 = vsel %vm688, %v885, %v900
        %v903 = vunpack.c.l.s4 1934713408
        %v904 = vunpack.c.0.s8 %v903
        %v905 = vperm.slane %v899, %v904
        %v907 = vunpack.c.l.s4 1934713408
        %v908 = vunpack.c.0.s8 %v907
        %v909 = vperm.slane %v901, %v908
        %v910 = vrot.slane %v905, 4
        %v911 = vsel %vm688, %v910, %v893
        %v912 = vrot.slane %v893, 4
        %v913 = vsel %vm688, %v905, %v912
        %v914 = vrot.slane %v909, 4
        %v915 = vsel %vm688, %v914, %v897
        %v916 = vrot.slane %v897, 4
        %v917 = vsel %vm688, %v909, %v916
        %v918 = vld [vmem:[#allocation2] sm:$0xff]
        %v919 = vld [vmem:[#allocation2 + $0x8] sm:$0xff]
        %v920 = vld [vmem:[#allocation2 + $0x10] sm:$0xff]
        %v921 = vld [vmem:[#allocation2 + $0x18] sm:$0xff]
        %v922 = vld [vmem:[#allocation11] sm:$0xff]
        %vm923 = vcmask 64512
        %v925 = vsel %vm923, %v918, 0
        %v928 = vsel %vm923, %v791, 0
        %930 = vmatpush.xpose.msra.mxu0 0.0
        %931 = vmatpush.xpose.msra.mxu0 0.0
        %932 = vmatpush.xpose.msra.mxu0 0.0
        %933 = vmatpush.xpose.msra.mxu0 0.0
        %934 = vmatpush.xpose.msra.mxu0 0.0
        %935 = vmatpush.xpose.msra.mxu0 0.0
        %936 = vmatpush.xpose.msra.mxu0 0.0
        %937 = vmatpush.xpose.msra.mxu0 0.0
        %938 = vmatpush.xpose.msra.mxu0 0.0
        %939 = vmatpush.xpose.msra.mxu0 0.0
        %940 = vmatpush.xpose.msra.mxu0 0.0
        %941 = vmatpush.xpose.msra.mxu0 0.0
        %942 = vmatpush.xpose.msra.mxu0 0.0
        %943 = vmatpush.xpose.msra.mxu0 0.0
        %944 = vmatpush.xpose.msra.mxu0 0.0
        %945 = vmatpush.xpose.msra.mxu0 %v928
        %946 = vmatmul.f32.gmra.mxu0 %v925
        %v947 = vpop.f32.mrf.mxu0
        %v948 = vadd.f32 %v922, %v947
        %949 = vdwg.mxu0
        %v951 = vsel %vm923, %v919, 0
        %v954 = vsel %vm923, %v793, 0
        %956 = vmatpush.xpose.msra.mxu0 0.0
        %957 = vmatpush.xpose.msra.mxu0 0.0
        %958 = vmatpush.xpose.msra.mxu0 0.0
        %959 = vmatpush.xpose.msra.mxu0 0.0
        %960 = vmatpush.xpose.msra.mxu0 0.0
        %961 = vmatpush.xpose.msra.mxu0 0.0
        %962 = vmatpush.xpose.msra.mxu0 0.0
        %963 = vmatpush.xpose.msra.mxu0 0.0
        %964 = vmatpush.xpose.msra.mxu0 0.0
        %965 = vmatpush.xpose.msra.mxu0 0.0
        %966 = vmatpush.xpose.msra.mxu0 0.0
        %967 = vmatpush.xpose.msra.mxu0 0.0
        %968 = vmatpush.xpose.msra.mxu0 0.0
        %969 = vmatpush.xpose.msra.mxu0 0.0
        %970 = vmatpush.xpose.msra.mxu0 0.0
        %971 = vmatpush.xpose.msra.mxu0 %v954
        %972 = vmatmul.f32.gmra.mxu0 %v951
        %v973 = vpop.f32.mrf.mxu0
        %v974 = vadd.f32 %v922, %v973
        %975 = vdwg.mxu0
        %v977 = vsel %vm923, %v920, 0
        %v980 = vsel %vm923, %v795, 0
        %982 = vmatpush.xpose.msra.mxu0 0.0
        %983 = vmatpush.xpose.msra.mxu0 0.0
        %984 = vmatpush.xpose.msra.mxu0 0.0
        %985 = vmatpush.xpose.msra.mxu0 0.0
        %986 = vmatpush.xpose.msra.mxu0 0.0
        %987 = vmatpush.xpose.msra.mxu0 0.0
        %988 = vmatpush.xpose.msra.mxu0 0.0
        %989 = vmatpush.xpose.msra.mxu0 0.0
        %990 = vmatpush.xpose.msra.mxu0 0.0
        %991 = vmatpush.xpose.msra.mxu0 0.0
        %992 = vmatpush.xpose.msra.mxu0 0.0
        %993 = vmatpush.xpose.msra.mxu0 0.0
        %994 = vmatpush.xpose.msra.mxu0 0.0
        %995 = vmatpush.xpose.msra.mxu0 0.0
        %996 = vmatpush.xpose.msra.mxu0 0.0
        %997 = vmatpush.xpose.msra.mxu0 %v980
        %998 = vmatmul.f32.gmra.mxu0 %v977
        %v999 = vpop.f32.mrf.mxu0
        %v1000 = vadd.f32 %v922, %v999
        %1001 = vdwg.mxu0
        %v1003 = vsel %vm923, %v921, 0
        %v1006 = vsel %vm923, %v797, 0
        %1008 = vmatpush.xpose.msra.mxu0 0.0
        %1009 = vmatpush.xpose.msra.mxu0 0.0
        %1010 = vmatpush.xpose.msra.mxu0 0.0
        %1011 = vmatpush.xpose.msra.mxu0 0.0
        %1012 = vmatpush.xpose.msra.mxu0 0.0
        %1013 = vmatpush.xpose.msra.mxu0 0.0
        %1014 = vmatpush.xpose.msra.mxu0 0.0
        %1015 = vmatpush.xpose.msra.mxu0 0.0
        %1016 = vmatpush.xpose.msra.mxu0 0.0
        %1017 = vmatpush.xpose.msra.mxu0 0.0
        %1018 = vmatpush.xpose.msra.mxu0 0.0
        %1019 = vmatpush.xpose.msra.mxu0 0.0
        %1020 = vmatpush.xpose.msra.mxu0 0.0
        %1021 = vmatpush.xpose.msra.mxu0 0.0
        %1022 = vmatpush.xpose.msra.mxu0 0.0
        %1023 = vmatpush.xpose.msra.mxu0 %v1006
        %1024 = vmatmul.f32.gmra.mxu0 %v1003
        %v1025 = vpop.f32.mrf.mxu0
        %v1026 = vadd.f32 %v922, %v1025
        %1027 = vdwg.mxu0
        %v1028 = vld [vmem:[#allocation3] sm:$0xff]
        %v1029 = vld [vmem:[#allocation3 + $0x8] sm:$0xff]
        %v1030 = vld [vmem:[#allocation3 + $0x10] sm:$0xff]
        %v1031 = vld [vmem:[#allocation3 + $0x18] sm:$0xff]
        %v1032 = vsel %vm923, %v948, -inf
        %1033 = vmax.xlane.f32.xlu0 %v1032
        %v1034 = vpop.xlane.xlu0 %1033
        %v1035 = vsel %vm923, %v974, -inf
        %1036 = vmax.xlane.f32.xlu0 %v1035
        %v1037 = vpop.xlane.xlu0 %1036
        %v1038 = vsel %vm923, %v1000, -inf
        %1039 = vmax.xlane.f32.xlu0 %v1038
        %v1040 = vpop.xlane.xlu0 %1039
        %v1041 = vsel %vm923, %v1026, -inf
        %1042 = vmax.xlane.f32.xlu0 %v1041
        %v1043 = vpop.xlane.xlu0 %1042
        %v1044 = vmax.f32 %v1028, %v1034
        %v1045 = vmax.f32 %v1029, %v1037
        %v1046 = vmax.f32 %v1030, %v1040
        %v1047 = vmax.f32 %v1031, %v1043
        %v1048 = vsub.f32 %v1028, %v1044
        %v1049 = vsub.f32 %v1029, %v1045
        %v1050 = vsub.f32 %v1030, %v1046
        %v1051 = vsub.f32 %v1031, %v1047
        %v1052 = vmul.f32 %v1048, 1.442695
        %v1053 = vpow.pop %v1052
        %v1054 = vmul.f32 %v1049, 1.442695
        %v1055 = vpow.pop %v1054
        %v1056 = vmul.f32 %v1050, 1.442695
        %v1057 = vpow.pop %v1056
        %v1058 = vmul.f32 %v1051, 1.442695
        %v1059 = vpow.pop %v1058
        %1061 = vset.pattern.permute.xlu0 0
        %1062 = vperm.xlu0 %1061, %v1044
        %v1063 = vpop.permute.xlu0 %1062
        %1066 = vset.pattern.permute.xlu0 0
        %1067 = vperm.xlu0 %1066, %v1045
        %v1068 = vpop.permute.xlu0 %1067
        %1071 = vset.pattern.permute.xlu0 0
        %1072 = vperm.xlu0 %1071, %v1046
        %v1073 = vpop.permute.xlu0 %1072
        %1076 = vset.pattern.permute.xlu0 0
        %1077 = vperm.xlu0 %1076, %v1047
        %v1078 = vpop.permute.xlu0 %1077
        %v1080 = vsub.f32 %v948, %v1063
        %v1081 = vsub.f32 %v974, %v1068
        %v1082 = vsub.f32 %v1000, %v1073
        %v1083 = vsub.f32 %v1026, %v1078
        %v1084 = vmul.f32 %v1080, 1.442695
        %v1085 = vpow.pop %v1084
        %v1086 = vmul.f32 %v1081, 1.442695
        %v1087 = vpow.pop %v1086
        %v1088 = vmul.f32 %v1082, 1.442695
        %v1089 = vpow.pop %v1088
        %v1090 = vmul.f32 %v1083, 1.442695
        %v1091 = vpow.pop %v1090
        %v1092 = vld [vmem:[#allocation4] sm:$0xff]
        %v1093 = vld [vmem:[#allocation4 + $0x8] sm:$0xff]
        %v1094 = vld [vmem:[#allocation4 + $0x10] sm:$0xff]
        %v1095 = vld [vmem:[#allocation4 + $0x18] sm:$0xff]
        %v1096 = vmul.f32 %v1053, %v1092
        %v1097 = vmul.f32 %v1055, %v1093
        %v1098 = vmul.f32 %v1057, %v1094
        %v1099 = vmul.f32 %v1059, %v1095
        %v1100 = vsel %vm923, %v1085, 0.0
        %1101 = vadd.xlane.f32.xlu0 %v1100
        %v1102 = vpop.xlane.xlu0 %1101
        %v1103 = vsel %vm923, %v1087, 0.0
        %1104 = vadd.xlane.f32.xlu0 %v1103
        %v1105 = vpop.xlane.xlu0 %1104
        %v1106 = vsel %vm923, %v1089, 0.0
        %1107 = vadd.xlane.f32.xlu0 %v1106
        %v1108 = vpop.xlane.xlu0 %1107
        %v1109 = vsel %vm923, %v1091, 0.0
        %1110 = vadd.xlane.f32.xlu0 %v1109
        %v1111 = vpop.xlane.xlu0 %1110
        %v1112 = vadd.f32 %v1096, %v1102
        %v1113 = vadd.f32 %v1097, %v1105
        %v1114 = vadd.f32 %v1098, %v1108
        %v1115 = vadd.f32 %v1099, %v1111
        %vm1116 = vcmask 7168
        %1117 = vst.msk [vmem:[#allocation4] sm:$0xff] %vm1116, %v1112
        %1118 = vst.msk [vmem:[#allocation4 + $0x8] sm:$0xff] %vm1116, %v1113
        %1119 = vst.msk [vmem:[#allocation4 + $0x10] sm:$0xff] %vm1116, %v1114
        %1120 = vst.msk [vmem:[#allocation4 + $0x18] sm:$0xff] %vm1116, %v1115
        %v1121 = vld [vmem:[#allocation5] sm:$0xff]
        %v1122 = vld [vmem:[#allocation5 + $0x8] sm:$0xff]
        %v1123 = vld [vmem:[#allocation5 + $0x10] sm:$0xff]
        %v1124 = vld [vmem:[#allocation5 + $0x18] sm:$0xff]
        %1126 = vset.pattern.permute.xlu0 0
        %1127 = vperm.xlu0 %1126, %v1053
        %v1128 = vpop.permute.xlu0 %1127
        %1131 = vset.pattern.permute.xlu0 0
        %1132 = vperm.xlu0 %1131, %v1055
        %v1133 = vpop.permute.xlu0 %1132
        %1136 = vset.pattern.permute.xlu0 0
        %1137 = vperm.xlu0 %1136, %v1057
        %v1138 = vpop.permute.xlu0 %1137
        %1141 = vset.pattern.permute.xlu0 0
        %1142 = vperm.xlu0 %1141, %v1059
        %v1143 = vpop.permute.xlu0 %1142
        %v1145 = vmul.f32 %v1128, %v1121
        %v1146 = vmul.f32 %v1133, %v1122
        %v1147 = vmul.f32 %v1138, %v1123
        %v1148 = vmul.f32 %v1143, %v1124
        %v1150 = vsel %vm923, %v1085, 0
        %1152 = vmatpush.msra.mxu0 0.0
        %1153 = vmatpush.msra.mxu0 0.0
        %1154 = vmatpush.msra.mxu0 0.0
        %1155 = vmatpush.msra.mxu0 0.0
        %1156 = vmatpush.msra.mxu0 0.0
        %1157 = vmatpush.msra.mxu0 0.0
        %1158 = vmatpush.msra.mxu0 0.0
        %1159 = vmatpush.msra.mxu0 0.0
        %1160 = vmatpush.msra.mxu0 0.0
        %1161 = vmatpush.msra.mxu0 0.0
        %1162 = vmatpush.msra.mxu0 0.0
        %1163 = vmatpush.msra.mxu0 0.0
        %1164 = vmatpush.msra.mxu0 0.0
        %1165 = vmatpush.msra.mxu0 0.0
        %1166 = vmatpush.msra.mxu0 0.0
        %1167 = vmatpush.msra.mxu0 %v911
        %1168 = vmatmul.f32.gmra.mxu0 %v1150
        %v1169 = vpop.f32.mrf.mxu0
        %v1170 = vadd.f32 0.0, %v1169
        %1171 = vdwg.mxu0
        %v1173 = vsel %vm923, %v1087, 0
        %1175 = vmatpush.msra.mxu0 0.0
        %1176 = vmatpush.msra.mxu0 0.0
        %1177 = vmatpush.msra.mxu0 0.0
        %1178 = vmatpush.msra.mxu0 0.0
        %1179 = vmatpush.msra.mxu0 0.0
        %1180 = vmatpush.msra.mxu0 0.0
        %1181 = vmatpush.msra.mxu0 0.0
        %1182 = vmatpush.msra.mxu0 0.0
        %1183 = vmatpush.msra.mxu0 0.0
        %1184 = vmatpush.msra.mxu0 0.0
        %1185 = vmatpush.msra.mxu0 0.0
        %1186 = vmatpush.msra.mxu0 0.0
        %1187 = vmatpush.msra.mxu0 0.0
        %1188 = vmatpush.msra.mxu0 0.0
        %1189 = vmatpush.msra.mxu0 0.0
        %1190 = vmatpush.msra.mxu0 %v913
        %1191 = vmatmul.f32.gmra.mxu0 %v1173
        %v1192 = vpop.f32.mrf.mxu0
        %v1193 = vadd.f32 0.0, %v1192
        %1194 = vdwg.mxu0
        %v1196 = vsel %vm923, %v1089, 0
        %1198 = vmatpush.msra.mxu0 0.0
        %1199 = vmatpush.msra.mxu0 0.0
        %1200 = vmatpush.msra.mxu0 0.0
        %1201 = vmatpush.msra.mxu0 0.0
        %1202 = vmatpush.msra.mxu0 0.0
        %1203 = vmatpush.msra.mxu0 0.0
        %1204 = vmatpush.msra.mxu0 0.0
        %1205 = vmatpush.msra.mxu0 0.0
        %1206 = vmatpush.msra.mxu0 0.0
        %1207 = vmatpush.msra.mxu0 0.0
        %1208 = vmatpush.msra.mxu0 0.0
        %1209 = vmatpush.msra.mxu0 0.0
        %1210 = vmatpush.msra.mxu0 0.0
        %1211 = vmatpush.msra.mxu0 0.0
        %1212 = vmatpush.msra.mxu0 0.0
        %1213 = vmatpush.msra.mxu0 %v915
        %1214 = vmatmul.f32.gmra.mxu0 %v1196
        %v1215 = vpop.f32.mrf.mxu0
        %v1216 = vadd.f32 0.0, %v1215
        %1217 = vdwg.mxu0
        %v1219 = vsel %vm923, %v1091, 0
        %1221 = vmatpush.msra.mxu0 0.0
        %1222 = vmatpush.msra.mxu0 0.0
        %1223 = vmatpush.msra.mxu0 0.0
        %1224 = vmatpush.msra.mxu0 0.0
        %1225 = vmatpush.msra.mxu0 0.0
        %1226 = vmatpush.msra.mxu0 0.0
        %1227 = vmatpush.msra.mxu0 0.0
        %1228 = vmatpush.msra.mxu0 0.0
        %1229 = vmatpush.msra.mxu0 0.0
        %1230 = vmatpush.msra.mxu0 0.0
        %1231 = vmatpush.msra.mxu0 0.0
        %1232 = vmatpush.msra.mxu0 0.0
        %1233 = vmatpush.msra.mxu0 0.0
        %1234 = vmatpush.msra.mxu0 0.0
        %1235 = vmatpush.msra.mxu0 0.0
        %1236 = vmatpush.msra.mxu0 %v917
        %1237 = vmatmul.f32.gmra.mxu0 %v1219
        %v1238 = vpop.f32.mrf.mxu0
        %v1239 = vadd.f32 0.0, %v1238
        %1240 = vdwg.mxu0
        %v1241 = vadd.f32 %v1145, %v1170
        %v1242 = vadd.f32 %v1146, %v1193
        %v1243 = vadd.f32 %v1147, %v1216
        %v1244 = vadd.f32 %v1148, %v1239
        %1245 = vst.msk [vmem:[#allocation5] sm:$0xff] %vm923, %v1241
        %1246 = vst.msk [vmem:[#allocation5 + $0x8] sm:$0xff] %vm923, %v1242
        %1247 = vst.msk [vmem:[#allocation5 + $0x10] sm:$0xff] %vm923, %v1243
        %1248 = vst.msk [vmem:[#allocation5 + $0x18] sm:$0xff] %vm923, %v1244
        %1249 = vst.msk [vmem:[#allocation3] sm:$0xff] %vm1116, %v1044
        %1250 = vst.msk [vmem:[#allocation3 + $0x8] sm:$0xff] %vm1116, %v1045
        %1251 = vst.msk [vmem:[#allocation3 + $0x10] sm:$0xff] %vm1116, %v1046
        %1252 = vst.msk [vmem:[#allocation3 + $0x18] sm:$0xff] %vm1116, %v1047
        // Predicated region
        $region81: #{tpu_custom_call.1} parent=47 // pred_check
          %p1253 = pneg %p452
        $region82: #{tpu_custom_call.1} parent=47 // pred_check_branch
          %1255 = sbr.rel (%p1253) target = $region84
        $region83: #{tpu_custom_call.1} parent=47 // pred_region
          %v1256 = vld [vmem:[#allocation5] sm:$0xff]
          %v1257 = vld [vmem:[#allocation5 + $0x8] sm:$0xff]
          %v1258 = vld [vmem:[#allocation5 + $0x10] sm:$0xff]
          %v1259 = vld [vmem:[#allocation5 + $0x18] sm:$0xff]
          %v1260 = vld [vmem:[#allocation4] sm:$0xff]
          %v1261 = vld [vmem:[#allocation4 + $0x8] sm:$0xff]
          %v1262 = vld [vmem:[#allocation4 + $0x10] sm:$0xff]
          %v1263 = vld [vmem:[#allocation4 + $0x18] sm:$0xff]
          %v1264 = vrcp.pop %v1260
          %v1265 = vrcp.pop %v1261
          %v1266 = vrcp.pop %v1262
          %v1267 = vrcp.pop %v1263
          %1269 = vset.pattern.permute.xlu0 0
          %1270 = vperm.xlu0 %1269, %v1264
          %v1271 = vpop.permute.xlu0 %1270
          %1274 = vset.pattern.permute.xlu0 0
          %1275 = vperm.xlu0 %1274, %v1265
          %v1276 = vpop.permute.xlu0 %1275
          %1279 = vset.pattern.permute.xlu0 0
          %1280 = vperm.xlu0 %1279, %v1266
          %v1281 = vpop.permute.xlu0 %1280
          %1284 = vset.pattern.permute.xlu0 0
          %1285 = vperm.xlu0 %1284, %v1267
          %v1286 = vpop.permute.xlu0 %1285
          %v1288 = vmul.f32 %v1256, %v1271
          %v1289 = vmul.f32 %v1257, %v1276
          %v1290 = vmul.f32 %v1258, %v1281
          %v1291 = vmul.f32 %v1259, %v1286
          %v1292 = vrot.slane %v1290, 4
          %v1293 = vsel %vm688, %v1292, %v1288
          %v1294 = vrot.slane %v1288, 4
          %v1295 = vsel %vm688, %v1290, %v1294
          %v1297 = vunpack.c.l.s4 1983009808
          %v1298 = vunpack.c.0.s8 %v1297
          %v1299 = vperm.slane %v1293, %v1298
          %v1301 = vunpack.c.l.s4 1983009808
          %v1302 = vunpack.c.0.s8 %v1301
          %v1303 = vperm.slane %v1295, %v1302
          %v1304 = vrot.slane %v1291, 4
          %v1305 = vsel %vm688, %v1304, %v1289
          %v1306 = vrot.slane %v1289, 4
          %v1307 = vsel %vm688, %v1291, %v1306
          %v1309 = vunpack.c.l.s4 1983009808
          %v1310 = vunpack.c.0.s8 %v1309
          %v1311 = vperm.slane %v1305, %v1310
          %v1313 = vunpack.c.l.s4 1983009808
          %v1314 = vunpack.c.0.s8 %v1313
          %v1315 = vperm.slane %v1307, %v1314
          %v1316 = vrot.slane %v1311, 4
          %v1317 = vsel %vm688, %v1316, %v1299
          %v1318 = vrot.slane %v1299, 4
          %v1319 = vsel %vm688, %v1311, %v1318
          %v1321 = vunpack.c.l.s4 1934713408
          %v1322 = vunpack.c.0.s8 %v1321
          %v1323 = vperm.slane %v1317, %v1322
          %v1325 = vunpack.c.l.s4 1934713408
          %v1326 = vunpack.c.0.s8 %v1325
          %v1327 = vperm.slane %v1319, %v1326
          %v1328 = vrot.slane %v1315, 4
          %v1329 = vsel %vm688, %v1328, %v1303
          %v1330 = vrot.slane %v1303, 4
          %v1331 = vsel %vm688, %v1315, %v1330
          %v1333 = vunpack.c.l.s4 1934713408
          %v1334 = vunpack.c.0.s8 %v1333
          %v1335 = vperm.slane %v1329, %v1334
          %v1337 = vunpack.c.l.s4 1934713408
          %v1338 = vunpack.c.0.s8 %v1337
          %v1339 = vperm.slane %v1331, %v1338
          %v1340 = vrot.slane %v1323, 4
          %v1341 = vsel %vm688, 0.0, %v1340
          %v1342 = vrot.slane %v1327, 4
          %v1343 = vsel %vm688, 0.0, %v1342
          %v1344 = vrot.slane %v1335, 4
          %v1345 = vsel %vm688, 0.0, %v1344
          %v1346 = vrot.slane %v1339, 4
          %v1347 = vsel %vm688, 0.0, %v1346
          %v1348 = vsel %vm688, %v1342, %v1323
          %v1350 = vunpack.c.l.s4 1983009808
          %v1351 = vunpack.c.0.s8 %v1350
          %v1352 = vperm.slane %v1348, %v1351
          %v1353 = vrot.slane %v1343, 4
          %v1354 = vsel %vm688, %v1353, %v1341
          %v1356 = vunpack.c.l.s4 1983009808
          %v1357 = vunpack.c.0.s8 %v1356
          %v1358 = vperm.slane %v1354, %v1357
          %v1359 = vsel %vm688, %v1346, %v1335
          %v1361 = vunpack.c.l.s4 1983009808
          %v1362 = vunpack.c.0.s8 %v1361
          %v1363 = vperm.slane %v1359, %v1362
          %v1364 = vrot.slane %v1347, 4
          %v1365 = vsel %vm688, %v1364, %v1345
          %v1367 = vunpack.c.l.s4 1983009808
          %v1368 = vunpack.c.0.s8 %v1367
          %v1369 = vperm.slane %v1365, %v1368
          %v1370 = vrot.slane %v1358, 4
          %v1371 = vsel %vm688, %v1370, %v1352
          %v1372 = vrot.slane %v1352, 4
          %v1373 = vsel %vm688, %v1358, %v1372
          %v1375 = vunpack.c.l.s4 1934713408
          %v1376 = vunpack.c.0.s8 %v1375
          %v1377 = vperm.slane %v1371, %v1376
          %v1379 = vunpack.c.l.s4 1934713408
          %v1380 = vunpack.c.0.s8 %v1379
          %v1381 = vperm.slane %v1373, %v1380
          %v1382 = vrot.slane %v1369, 4
          %v1383 = vsel %vm688, %v1382, %v1363
          %v1384 = vrot.slane %v1363, 4
          %v1385 = vsel %vm688, %v1369, %v1384
          %v1387 = vunpack.c.l.s4 1934713408
          %v1388 = vunpack.c.0.s8 %v1387
          %v1389 = vperm.slane %v1383, %v1388
          %v1391 = vunpack.c.l.s4 1934713408
          %v1392 = vunpack.c.0.s8 %v1391
          %v1393 = vperm.slane %v1385, %v1392
          %v1394 = vrot.slane %v1389, 4
          %v1395 = vsel %vm688, %v1394, %v1377
          %v1396 = vrot.slane %v1377, 4
          %v1397 = vsel %vm688, %v1389, %v1396
          %v1398 = vrot.slane %v1393, 4
          %v1399 = vsel %vm688, %v1398, %v1381
          %v1400 = vrot.slane %v1381, 4
          %v1401 = vsel %vm688, %v1393, %v1400
          %1403 = vrot.lane.b32.xlu0 %v1397, 8
          %v1404 = vpop.permute.xlu0 %1403
          %1407 = vrot.lane.b32.xlu0 %v1399, 16
          %v1408 = vpop.permute.xlu0 %1407
          %1411 = vrot.lane.b32.xlu0 %v1401, 24
          %v1412 = vpop.permute.xlu0 %1411
          %v1414 = vsel %vm923, %v1395, %v1404
          %vm1415 = vcmask 130048
          %v1416 = vsel %vm1415, %v1414, %v1408
          %vm1417 = vcmask 195584
          %v1418 = vsel %vm1417, %v1416, %v1412
          %v1419 = vld [vmem:[#allocation17] sm:$0xff]
          %v1420 = vld [vmem:[#allocation17 + $0x8] sm:$0xff]
          %v1421 = vld [vmem:[#allocation17 + $0x10] sm:$0xff]
          %v1422 = vld [vmem:[#allocation17 + $0x18] sm:$0xff]
          %v1424 = vsel %vm629, %v1418, 0
          %1426 = vmatpush.msra.mxu0 0.0
          %1427 = vmatpush.msra.mxu0 0.0
          %1428 = vmatpush.msra.mxu0 0.0
          %1429 = vmatpush.msra.mxu0 0.0
          %1430 = vmatpush.msra.mxu0 0.0
          %1431 = vmatpush.msra.mxu0 0.0
          %1432 = vmatpush.msra.mxu0 0.0
          %1433 = vmatpush.msra.mxu0 0.0
          %1434 = vmatpush.msra.mxu0 0.0
          %1435 = vmatpush.msra.mxu0 0.0
          %1436 = vmatpush.msra.mxu0 0.0
          %1437 = vmatpush.msra.mxu0 0.0
          %1438 = vmatpush.msra.mxu0 %v1422
          %1439 = vmatpush.msra.mxu0 %v1421
          %1440 = vmatpush.msra.mxu0 %v1420
          %1441 = vmatpush.msra.mxu0 %v1419
          %1442 = vmatmul.f32.gmra.mxu0 %v1424
          %v1443 = vpop.f32.mrf.mxu0
          %v1444 = vadd.f32 0.0, %v1443
          %1445 = vdwg.mxu0
          %1446 = vst.msk [vmem:[%s451] sm:$0xff] %vm629, %v1444
        $region84: #{tpu_custom_call.1} parent=47 // pred_fallthru
          _
        %s1447 = sand.u32 %s226, 1
        %s1448 = scalar_lea.sflag [#allocation8], %s1447
        %s1449 = sand.u32 %s226, 1
        %s1450 = smul.addr %s1449, 8
        %s1451 = scalar_lea.vmem [#allocation18], %s1450
        // Predicated region
        $region85: #{tpu_custom_call.1} parent=47 // pred_check
          %p1452 = pneg %p236
        $region86: #{tpu_custom_call.1} parent=47 // pred_check_branch
          %1454 = sbr.rel (%p1452) target = $region88
        $region87: #{tpu_custom_call.1} parent=47 // pred_region
          %1456 = vsyncadd %s1448, 0
          %s1457 = sadd.s32 %s35, %s34
          %s1458 = smul.addr %s1457, 8
          %s1459 = scalar_lea.hbm %s7, %s1458
          %s1461 = sshll.u32 %s1451, 4
          %s1462 = int_to_ptr.vmem [resolvable:$true] %s1461
          %s1463 = sshll.u32 %s1459, 4
          %s1464 = int_to_ptr.hbm [resolvable:$true] %s1463
          %1466 = dma.vmem_to_hbm [thread:$0]  %s1462, 128, %s1464, %s1448
        $region88: #{tpu_custom_call.1} parent=47 // pred_fallthru
          _
      $region48: #{tpu_custom_call.1} parent=5 // pred_fallthru
        _
      %p1467 = scmp.le.s32.totalorder 2, %s24
      // Predicated region
      $region89: #{tpu_custom_call.1} parent=5 // pred_check
        %p1468 = pneg %p1467
      $region90: #{tpu_custom_call.1} parent=5 // pred_check_branch
        %1470 = sbr.rel (%p1468) target = $region92
      $region91: #{tpu_custom_call.1} parent=5 // pred_region
        %s1471 = ssub.s32 %s24, 2
        // Predicated region
        $region93: #{tpu_custom_call.1} parent=91 // pred_check
          %p1472 = pneg %p242
        $region94: #{tpu_custom_call.1} parent=91 // pred_check_branch
          %1474 = sbr.rel (%p1472) target = $region96
        $region95: #{tpu_custom_call.1} parent=91 // pred_region
          %s1475 = sand.u32 %s227, 1
          %s1476 = scalar_lea.sflag [#allocation8], %s1475
          %s1477 = sand.u32 %s227, 1
          %s1478 = smul.addr %s1477, 8
          %s1479 = scalar_lea.vmem [#allocation18], %s1478
          %1481 = dma.done %s1476, 128
        $region96: #{tpu_custom_call.1} parent=91 // pred_fallthru
          _
      $region92: #{tpu_custom_call.1} parent=5 // pred_fallthru
        _
    $region6: #{tpu_custom_call.1} parent=1 // loop_footer
      %s28 = sadd.s32 1, %s24
    $region7: #{tpu_custom_call.1} parent=1 // loop_footer_branch
      %23 = sbr.rel target = $region3
    $region8: #{tpu_custom_call.1} parent=1 // loop_exit
      _
    %1482 = vsyncpa [#allocation7], 1
    %s1483 = scalar_lea.sflag [#allocation7], 1
    %1484 = vsyncpa %s1483, 1
    %1485 = vsyncpa [#allocation10], 1
    %s1486 = scalar_lea.sflag [#allocation10], 1
    %1487 = vsyncpa %s1486, 1
    %1488 = vsyncpa [#allocation13], 1
    %1489 = vsyncpa [#allocation16], 1
    %1490 = vsyncpa [#allocation8], 1
    %s1491 = scalar_lea.sflag [#allocation8], 1
    %1492 = vsyncpa %s1491, 1

</llo_original>
